<compile_context>
chip_gen: v6e
topology: v6e:2x2x1
jax: 0.10.0
libtpu: 0.0.40
codegen_flags: <defaults>
</compile_context>

<pallas_src>
import functools

import jax
import jax.numpy as jnp
from jax import lax
from jax.experimental import pallas as pl
from jax.experimental.pallas import tpu as pltpu


def _resblock_kernel(x_ref, wdw_ref, wpw_ref, beff_ref, out_ref, pad_ref,
                     *, H, W, C, K):
    """One batch element per grid step.

    x_ref    : (1, C, H, W)     VMEM input tile (NCHW; W on lanes, H on sublanes)
    wdw_ref  : (K*K*C,)         SMEM depthwise weights, index (dy*K+dx)*C + c
    wpw_ref  : (C*C,)           SMEM pointwise weights, index co*C + ci
    beff_ref : (C,)             SMEM effective bias  b_pw + w_pw @ b_dw
    out_ref  : (1, C, H, W)     VMEM output tile
    pad_ref  : (C, H+2p, W+2p)  VMEM scratch (zero halo ring per channel)
    """
    p = K // 2
    Hp, Wp = H + 2 * p, W + 2 * p
    f32 = jnp.float32

    # --- zero only the halo border, once per step (interior always rewritten;
    # --- the ring is shared by both conv applications) ------------------------
    if p > 0:
        pad_ref[:, 0:p, :] = jnp.zeros((C, p, Wp), f32)
        pad_ref[:, H + p:Hp, :] = jnp.zeros((C, p, Wp), f32)
        pad_ref[:, :, 0:p] = jnp.zeros((C, Hp, p), f32)
        pad_ref[:, :, W + p:Wp] = jnp.zeros((C, Hp, p), f32)

    def dwpw():
        """Shared-weight depthwise KxK -> pointwise 1x1 (+ folded bias).
        Assumes pad_ref interior already holds the input planes."""
        # depthwise: K*K statically-unrolled taps, ONE whole-(C,H,W) read per
        # tap, per-channel SMEM scalar weight folded into the accumulator.
        acc = [None] * C
        for dy in range(K):
            for dx in range(K):
                t = pad_ref[:, dy:dy + H, dx:dx + W]          # (C, H, W)
                base = (dy * K + dx) * C
                for c in range(C):
                    v = t[c] * wdw_ref[base + c]
                    acc[c] = v if acc[c] is None else acc[c] + v

        # pointwise 1x1: small-C channel mix as CxC scalar MACs on the VPU
        outs = []
        for co in range(C):
            o = acc[0] * wpw_ref[co * C + 0]
            for ci in range(1, C):
                o = o + acc[ci] * wpw_ref[co * C + ci]
            outs.append(o + beff_ref[co])
        return outs

    # conv block 1: fill interior with x in a single whole-(C,H,W) store
    pad_ref[:, p:p + H, p:p + W] = x_ref[0].astype(f32)
    y1 = dwpw()

    # relu fused into the interior refill for conv block 2
    for c in range(C):
        pad_ref[c, p:p + H, p:p + W] = jnp.maximum(y1[c], 0.0)
    y2 = dwpw()

    # residual add: re-read x (short live range), per-channel output stores
    for c in range(C):
        out_ref[0, c] = (x_ref[0, c].astype(f32) + y2[c]).astype(out_ref.dtype)


def resblock_forward(x_nchw, w_dw_oihw, b_dw, w_pw_oihw, b_pw, K):
    """NCHW in / NCHW out.  Weights in PyTorch layouts:
       w_dw (C,1,K,K), b_dw (C,), w_pw (C,C,1,1), b_pw (C,)."""
    B, C, H, W = x_nchw.shape
    assert K % 2 == 1, "padding=K//2 matches 'same' only for odd K"
    p = K // 2
    f32 = jnp.float32

    # Pre-arrange / pre-cast parameters once (flat f32 SMEM scalar tables).
    wdw_flat = jnp.transpose(w_dw_oihw[:, 0].astype(f32), (1, 2, 0)).reshape(-1)
    wpw2d = w_pw_oihw[:, :, 0, 0].astype(f32)
    wpw_flat = wpw2d.reshape(-1)
    beff = b_pw.astype(f32) + wpw2d @ b_dw.astype(f32)   # fold depthwise bias

    kernel = functools.partial(_resblock_kernel, H=H, W=W, C=C, K=K)

    flops = int(B * 2 * (H * W * C * (K * K + C)) * 2)
    bytes_accessed = int(2 * B * C * H * W * x_nchw.dtype.itemsize
                         + (wdw_flat.size + wpw_flat.size + beff.size) * 4)

    return pl.pallas_call(
        kernel,
        out_shape=jax.ShapeDtypeStruct((B, C, H, W), x_nchw.dtype),
        grid_spec=pltpu.PrefetchScalarGridSpec(
            num_scalar_prefetch=0,
            grid=(B,),
            in_specs=[
                pl.BlockSpec((1, C, H, W), lambda b: (b, 0, 0, 0)),
                pl.BlockSpec(memory_space=pltpu.MemorySpace.SMEM),
                pl.BlockSpec(memory_space=pltpu.MemorySpace.SMEM),
                pl.BlockSpec(memory_space=pltpu.MemorySpace.SMEM),
            ],
            out_specs=pl.BlockSpec((1, C, H, W), lambda b: (b, 0, 0, 0)),
            scratch_shapes=[pltpu.VMEM((C, H + 2 * p, W + 2 * p), jnp.float32)],
        ),
        compiler_params=pltpu.CompilerParams(
            dimension_semantics=("parallel",),
            vmem_limit_bytes=32 * 1024 * 1024),
        cost_estimate=pl.CostEstimate(
            flops=flops, transcendentals=0, bytes_accessed=bytes_accessed),
    )(x_nchw, wdw_flat, wpw_flat, beff)


def ref_forward(x, w_dw_oihw, b_dw, w_pw_oihw, b_pw, K):
    """Pure-JAX reference matching PyTorch semantics (NCHW)."""
    p = K // 2
    C = x.shape[1]

    def conv_block(inp):
        dw = lax.conv_general_dilated(
            inp, w_dw_oihw, (1, 1), [(p, p), (p, p)],
            dimension_numbers=("NCHW", "OIHW", "NCHW"),
            feature_group_count=C)
        dw = dw + b_dw[None, :, None, None]
        pw = lax.conv_general_dilated(
            dw, w_pw_oihw, (1, 1), [(0, 0), (0, 0)],
            dimension_numbers=("NCHW", "OIHW", "NCHW"))
        return pw + b_pw[None, :, None, None]

    y1 = jnp.maximum(conv_block(x), 0.0)
    return x + conv_block(y1)


if __name__ == "__main__":
    B, C, H, W, K = 2, 4, 16, 16, 3   # Resblock(out_c=4, kernel=3)

    key = jax.random.PRNGKey(0)
    k1, k2, k3, k4, k5 = jax.random.split(key, 5)
    x = jax.random.normal(k1, (B, C, H, W), jnp.float32)
    w_dw = jax.random.normal(k2, (C, 1, K, K), jnp.float32) * 0.1   # (O, I/g, K, K)
    b_dw = jax.random.normal(k3, (C,), jnp.float32) * 0.1
    w_pw = jax.random.normal(k4, (C, C, 1, 1), jnp.float32) * 0.1   # (O, I, 1, 1)
    b_pw = jax.random.normal(k5, (C,), jnp.float32) * 0.1

    out = resblock_forward(x, w_dw, b_dw, w_pw, b_pw, K)
    out = jax.block_until_ready(out)

    ref = ref_forward(x, w_dw, b_dw, w_pw, b_pw, K)
    assert out.shape == (B, C, H, W)
    assert jnp.allclose(out, ref, atol=1e-4, rtol=1e-4), "mismatch vs reference"

    print("KERNEL_OK")
</pallas_src>

<mosaic_0001>
module attributes {stable_mosaic.version = 11 : i64} {
  func.func @_resblock_kernel(%arg0: i32, %arg1: memref<1x4x16x16xf32, #tpu.memory_space<vmem>>, %arg2: memref<36xf32, #tpu.memory_space<smem>>, %arg3: memref<16xf32, #tpu.memory_space<smem>>, %arg4: memref<4xf32, #tpu.memory_space<smem>>, %arg5: memref<1x4x16x16xf32, #tpu.memory_space<vmem>>, %arg6: memref<4x18x18xf32, #tpu.memory_space<vmem>>) attributes {dimension_semantics = [#tpu.dimension_semantics<parallel>], iteration_bounds = array<i64: 2>, scalar_prefetch = 0 : i64, scratch_operands = 1 : i64, tpu.core_type = #tpu.core_type<tc>, window_params = [{transform_indices = @transform_0, window_bounds = array<i64: 1, 4, 16, 16>}, {transform_indices = @transform_1, window_bounds = array<i64: 36>}, {transform_indices = @transform_2, window_bounds = array<i64: 16>}, {transform_indices = @transform_3, window_bounds = array<i64: 4>}, {transform_indices = @transform_4, window_bounds = array<i64: 1, 4, 16, 16>}]} {
    %cst = arith.constant 0.000000e+00 : f32
    %0 = vector.broadcast %cst : f32 to vector<4x1x18xf32>
    %c0 = arith.constant 0 : index
    %c0_0 = arith.constant 0 : index
    %c0_1 = arith.constant 0 : index
    %1 = vector.load %arg6[%c0, %c0_0, %c0_1] : memref<4x18x18xf32, #tpu.memory_space<vmem>>, vector<4x1x18xf32>
    tpu.vector_store %arg6[%c0, %c0_0, %c0_1], %0 {strides = array<i32>} : memref<4x18x18xf32, #tpu.memory_space<vmem>>, vector<4x1x18xf32>,
    %cst_2 = arith.constant 0.000000e+00 : f32
    %2 = vector.broadcast %cst_2 : f32 to vector<4x1x18xf32>
    %c0_3 = arith.constant 0 : index
    %c17 = arith.constant 17 : index
    %c0_4 = arith.constant 0 : index
    %3 = vector.load %arg6[%c0_3, %c17, %c0_4] : memref<4x18x18xf32, #tpu.memory_space<vmem>>, vector<4x1x18xf32>
    tpu.vector_store %arg6[%c0_3, %c17, %c0_4], %2 {strides = array<i32>} : memref<4x18x18xf32, #tpu.memory_space<vmem>>, vector<4x1x18xf32>,
    %cst_5 = arith.constant 0.000000e+00 : f32
    %4 = vector.broadcast %cst_5 : f32 to vector<4x18x1xf32>
    %c0_6 = arith.constant 0 : index
    %c0_7 = arith.constant 0 : index
    %c0_8 = arith.constant 0 : index
    %5 = vector.load %arg6[%c0_6, %c0_7, %c0_8] : memref<4x18x18xf32, #tpu.memory_space<vmem>>, vector<4x18x1xf32>
    tpu.vector_store %arg6[%c0_6, %c0_7, %c0_8], %4 {strides = array<i32>} : memref<4x18x18xf32, #tpu.memory_space<vmem>>, vector<4x18x1xf32>,
    %cst_9 = arith.constant 0.000000e+00 : f32
    %6 = vector.broadcast %cst_9 : f32 to vector<4x18x1xf32>
    %c0_10 = arith.constant 0 : index
    %c0_11 = arith.constant 0 : index
    %c17_12 = arith.constant 17 : index
    %7 = vector.load %arg6[%c0_10, %c0_11, %c17_12] : memref<4x18x18xf32, #tpu.memory_space<vmem>>, vector<4x18x1xf32>
    tpu.vector_store %arg6[%c0_10, %c0_11, %c17_12], %6 {strides = array<i32>} : memref<4x18x18xf32, #tpu.memory_space<vmem>>, vector<4x18x1xf32>,
    %c0_13 = arith.constant 0 : index
    %c0_14 = arith.constant 0 : index
    %c0_15 = arith.constant 0 : index
    %c0_16 = arith.constant 0 : index
    %8 = vector.load %arg1[%c0_13, %c0_14, %c0_15, %c0_16] : memref<1x4x16x16xf32, #tpu.memory_space<vmem>>, vector<1x4x16x16xf32>
    %9 = vector.shape_cast %8 : vector<1x4x16x16xf32> to vector<4x16x16xf32>
    %c0_17 = arith.constant 0 : index
    %c1 = arith.constant 1 : index
    %c1_18 = arith.constant 1 : index
    %10 = vector.load %arg6[%c0_17, %c1, %c1_18] : memref<4x18x18xf32, #tpu.memory_space<vmem>>, vector<4x16x16xf32>
    tpu.vector_store %arg6[%c0_17, %c1, %c1_18], %9 {strides = array<i32>} : memref<4x18x18xf32, #tpu.memory_space<vmem>>, vector<4x16x16xf32>,
    %c0_19 = arith.constant 0 : index
    %c0_20 = arith.constant 0 : index
    %c0_21 = arith.constant 0 : index
    %11 = vector.load %arg6[%c0_19, %c0_20, %c0_21] : memref<4x18x18xf32, #tpu.memory_space<vmem>>, vector<4x16x16xf32>
    %12 = vector.extract_strided_slice %11 {offsets = [0, 0, 0], sizes = [1, 16, 16], strides = [1, 1, 1]} : vector<4x16x16xf32> to vector<1x16x16xf32>
    %13 = vector.shape_cast %12 : vector<1x16x16xf32> to vector<16x16xf32>
    %c0_22 = arith.constant 0 : index
    %14 = memref.load %arg2[%c0_22] : memref<36xf32, #tpu.memory_space<smem>>
    %15 = vector.broadcast %14 : f32 to vector<16x16xf32>
    %16 = arith.mulf %13, %15 : vector<16x16xf32>
    %17 = vector.extract_strided_slice %11 {offsets = [1, 0, 0], sizes = [1, 16, 16], strides = [1, 1, 1]} : vector<4x16x16xf32> to vector<1x16x16xf32>
    %18 = vector.shape_cast %17 : vector<1x16x16xf32> to vector<16x16xf32>
    %c1_23 = arith.constant 1 : index
    %19 = memref.load %arg2[%c1_23] : memref<36xf32, #tpu.memory_space<smem>>
    %20 = vector.broadcast %19 : f32 to vector<16x16xf32>
    %21 = arith.mulf %18, %20 : vector<16x16xf32>
    %22 = vector.extract_strided_slice %11 {offsets = [2, 0, 0], sizes = [1, 16, 16], strides = [1, 1, 1]} : vector<4x16x16xf32> to vector<1x16x16xf32>
    %23 = vector.shape_cast %22 : vector<1x16x16xf32> to vector<16x16xf32>
    %c2 = arith.constant 2 : index
    %24 = memref.load %arg2[%c2] : memref<36xf32, #tpu.memory_space<smem>>
    %25 = vector.broadcast %24 : f32 to vector<16x16xf32>
    %26 = arith.mulf %23, %25 : vector<16x16xf32>
    %27 = vector.extract_strided_slice %11 {offsets = [3, 0, 0], sizes = [1, 16, 16], strides = [1, 1, 1]} : vector<4x16x16xf32> to vector<1x16x16xf32>
    %28 = vector.shape_cast %27 : vector<1x16x16xf32> to vector<16x16xf32>
    %c3 = arith.constant 3 : index
    %29 = memref.load %arg2[%c3] : memref<36xf32, #tpu.memory_space<smem>>
    %30 = vector.broadcast %29 : f32 to vector<16x16xf32>
    %31 = arith.mulf %28, %30 : vector<16x16xf32>
    %c0_24 = arith.constant 0 : index
    %c0_25 = arith.constant 0 : index
    %c1_26 = arith.constant 1 : index
    %32 = vector.load %arg6[%c0_24, %c0_25, %c1_26] : memref<4x18x18xf32, #tpu.memory_space<vmem>>, vector<4x16x16xf32>
    %33 = vector.extract_strided_slice %32 {offsets = [0, 0, 0], sizes = [1, 16, 16], strides = [1, 1, 1]} : vector<4x16x16xf32> to vector<1x16x16xf32>
    %34 = vector.shape_cast %33 : vector<1x16x16xf32> to vector<16x16xf32>
    %c4 = arith.constant 4 : index
    %35 = memref.load %arg2[%c4] : memref<36xf32, #tpu.memory_space<smem>>
    %36 = vector.broadcast %35 : f32 to vector<16x16xf32>
    %37 = arith.mulf %34, %36 : vector<16x16xf32>
    %38 = arith.addf %16, %37 : vector<16x16xf32>
    %39 = vector.extract_strided_slice %32 {offsets = [1, 0, 0], sizes = [1, 16, 16], strides = [1, 1, 1]} : vector<4x16x16xf32> to vector<1x16x16xf32>
    %40 = vector.shape_cast %39 : vector<1x16x16xf32> to vector<16x16xf32>
    %c5 = arith.constant 5 : index
    %41 = memref.load %arg2[%c5] : memref<36xf32, #tpu.memory_space<smem>>
    %42 = vector.broadcast %41 : f32 to vector<16x16xf32>
    %43 = arith.mulf %40, %42 : vector<16x16xf32>
    %44 = arith.addf %21, %43 : vector<16x16xf32>
    %45 = vector.extract_strided_slice %32 {offsets = [2, 0, 0], sizes = [1, 16, 16], strides = [1, 1, 1]} : vector<4x16x16xf32> to vector<1x16x16xf32>
    %46 = vector.shape_cast %45 : vector<1x16x16xf32> to vector<16x16xf32>
    %c6 = arith.constant 6 : index
    %47 = memref.load %arg2[%c6] : memref<36xf32, #tpu.memory_space<smem>>
    %48 = vector.broadcast %47 : f32 to vector<16x16xf32>
    %49 = arith.mulf %46, %48 : vector<16x16xf32>
    %50 = arith.addf %26, %49 : vector<16x16xf32>
    %51 = vector.extract_strided_slice %32 {offsets = [3, 0, 0], sizes = [1, 16, 16], strides = [1, 1, 1]} : vector<4x16x16xf32> to vector<1x16x16xf32>
    %52 = vector.shape_cast %51 : vector<1x16x16xf32> to vector<16x16xf32>
    %c7 = arith.constant 7 : index
    %53 = memref.load %arg2[%c7] : memref<36xf32, #tpu.memory_space<smem>>
    %54 = vector.broadcast %53 : f32 to vector<16x16xf32>
    %55 = arith.mulf %52, %54 : vector<16x16xf32>
    %56 = arith.addf %31, %55 : vector<16x16xf32>
    %c0_27 = arith.constant 0 : index
    %c0_28 = arith.constant 0 : index
    %c2_29 = arith.constant 2 : index
    %57 = vector.load %arg6[%c0_27, %c0_28, %c2_29] : memref<4x18x18xf32, #tpu.memory_space<vmem>>, vector<4x16x16xf32>
    %58 = vector.extract_strided_slice %57 {offsets = [0, 0, 0], sizes = [1, 16, 16], strides = [1, 1, 1]} : vector<4x16x16xf32> to vector<1x16x16xf32>
    %59 = vector.shape_cast %58 : vector<1x16x16xf32> to vector<16x16xf32>
    %c8 = arith.constant 8 : index
    %60 = memref.load %arg2[%c8] : memref<36xf32, #tpu.memory_space<smem>>
    %61 = vector.broadcast %60 : f32 to vector<16x16xf32>
    %62 = arith.mulf %59, %61 : vector<16x16xf32>
    %63 = arith.addf %38, %62 : vector<16x16xf32>
    %64 = vector.extract_strided_slice %57 {offsets = [1, 0, 0], sizes = [1, 16, 16], strides = [1, 1, 1]} : vector<4x16x16xf32> to vector<1x16x16xf32>
    %65 = vector.shape_cast %64 : vector<1x16x16xf32> to vector<16x16xf32>
    %c9 = arith.constant 9 : index
    %66 = memref.load %arg2[%c9] : memref<36xf32, #tpu.memory_space<smem>>
    %67 = vector.broadcast %66 : f32 to vector<16x16xf32>
    %68 = arith.mulf %65, %67 : vector<16x16xf32>
    %69 = arith.addf %44, %68 : vector<16x16xf32>
    %70 = vector.extract_strided_slice %57 {offsets = [2, 0, 0], sizes = [1, 16, 16], strides = [1, 1, 1]} : vector<4x16x16xf32> to vector<1x16x16xf32>
    %71 = vector.shape_cast %70 : vector<1x16x16xf32> to vector<16x16xf32>
    %c10 = arith.constant 10 : index
    %72 = memref.load %arg2[%c10] : memref<36xf32, #tpu.memory_space<smem>>
    %73 = vector.broadcast %72 : f32 to vector<16x16xf32>
    %74 = arith.mulf %71, %73 : vector<16x16xf32>
    %75 = arith.addf %50, %74 : vector<16x16xf32>
    %76 = vector.extract_strided_slice %57 {offsets = [3, 0, 0], sizes = [1, 16, 16], strides = [1, 1, 1]} : vector<4x16x16xf32> to vector<1x16x16xf32>
    %77 = vector.shape_cast %76 : vector<1x16x16xf32> to vector<16x16xf32>
    %c11 = arith.constant 11 : index
    %78 = memref.load %arg2[%c11] : memref<36xf32, #tpu.memory_space<smem>>
    %79 = vector.broadcast %78 : f32 to vector<16x16xf32>
    %80 = arith.mulf %77, %79 : vector<16x16xf32>
    %81 = arith.addf %56, %80 : vector<16x16xf32>
    %c0_30 = arith.constant 0 : index
    %c1_31 = arith.constant 1 : index
    %c0_32 = arith.constant 0 : index
    %82 = vector.load %arg6[%c0_30, %c1_31, %c0_32] : memref<4x18x18xf32, #tpu.memory_space<vmem>>, vector<4x16x16xf32>
    %83 = vector.extract_strided_slice %82 {offsets = [0, 0, 0], sizes = [1, 16, 16], strides = [1, 1, 1]} : vector<4x16x16xf32> to vector<1x16x16xf32>
    %84 = vector.shape_cast %83 : vector<1x16x16xf32> to vector<16x16xf32>
    %c12 = arith.constant 12 : index
    %85 = memref.load %arg2[%c12] : memref<36xf32, #tpu.memory_space<smem>>
    %86 = vector.broadcast %85 : f32 to vector<16x16xf32>
    %87 = arith.mulf %84, %86 : vector<16x16xf32>
    %88 = arith.addf %63, %87 : vector<16x16xf32>
    %89 = vector.extract_strided_slice %82 {offsets = [1, 0, 0], sizes = [1, 16, 16], strides = [1, 1, 1]} : vector<4x16x16xf32> to vector<1x16x16xf32>
    %90 = vector.shape_cast %89 : vector<1x16x16xf32> to vector<16x16xf32>
    %c13 = arith.constant 13 : index
    %91 = memref.load %arg2[%c13] : memref<36xf32, #tpu.memory_space<smem>>
    %92 = vector.broadcast %91 : f32 to vector<16x16xf32>
    %93 = arith.mulf %90, %92 : vector<16x16xf32>
    %94 = arith.addf %69, %93 : vector<16x16xf32>
    %95 = vector.extract_strided_slice %82 {offsets = [2, 0, 0], sizes = [1, 16, 16], strides = [1, 1, 1]} : vector<4x16x16xf32> to vector<1x16x16xf32>
    %96 = vector.shape_cast %95 : vector<1x16x16xf32> to vector<16x16xf32>
    %c14 = arith.constant 14 : index
    %97 = memref.load %arg2[%c14] : memref<36xf32, #tpu.memory_space<smem>>
    %98 = vector.broadcast %97 : f32 to vector<16x16xf32>
    %99 = arith.mulf %96, %98 : vector<16x16xf32>
    %100 = arith.addf %75, %99 : vector<16x16xf32>
    %101 = vector.extract_strided_slice %82 {offsets = [3, 0, 0], sizes = [1, 16, 16], strides = [1, 1, 1]} : vector<4x16x16xf32> to vector<1x16x16xf32>
    %102 = vector.shape_cast %101 : vector<1x16x16xf32> to vector<16x16xf32>
    %c15 = arith.constant 15 : index
    %103 = memref.load %arg2[%c15] : memref<36xf32, #tpu.memory_space<smem>>
    %104 = vector.broadcast %103 : f32 to vector<16x16xf32>
    %105 = arith.mulf %102, %104 : vector<16x16xf32>
    %106 = arith.addf %81, %105 : vector<16x16xf32>
    %c0_33 = arith.constant 0 : index
    %c1_34 = arith.constant 1 : index
    %c1_35 = arith.constant 1 : index
    %107 = vector.load %arg6[%c0_33, %c1_34, %c1_35] : memref<4x18x18xf32, #tpu.memory_space<vmem>>, vector<4x16x16xf32>
    %108 = vector.extract_strided_slice %107 {offsets = [0, 0, 0], sizes = [1, 16, 16], strides = [1, 1, 1]} : vector<4x16x16xf32> to vector<1x16x16xf32>
    %109 = vector.shape_cast %108 : vector<1x16x16xf32> to vector<16x16xf32>
    %c16 = arith.constant 16 : index
    %110 = memref.load %arg2[%c16] : memref<36xf32, #tpu.memory_space<smem>>
    %111 = vector.broadcast %110 : f32 to vector<16x16xf32>
    %112 = arith.mulf %109, %111 : vector<16x16xf32>
    %113 = arith.addf %88, %112 : vector<16x16xf32>
    %114 = vector.extract_strided_slice %107 {offsets = [1, 0, 0], sizes = [1, 16, 16], strides = [1, 1, 1]} : vector<4x16x16xf32> to vector<1x16x16xf32>
    %115 = vector.shape_cast %114 : vector<1x16x16xf32> to vector<16x16xf32>
    %c17_36 = arith.constant 17 : index
    %116 = memref.load %arg2[%c17_36] : memref<36xf32, #tpu.memory_space<smem>>
    %117 = vector.broadcast %116 : f32 to vector<16x16xf32>
    %118 = arith.mulf %115, %117 : vector<16x16xf32>
    %119 = arith.addf %94, %118 : vector<16x16xf32>
    %120 = vector.extract_strided_slice %107 {offsets = [2, 0, 0], sizes = [1, 16, 16], strides = [1, 1, 1]} : vector<4x16x16xf32> to vector<1x16x16xf32>
    %121 = vector.shape_cast %120 : vector<1x16x16xf32> to vector<16x16xf32>
    %c18 = arith.constant 18 : index
    %122 = memref.load %arg2[%c18] : memref<36xf32, #tpu.memory_space<smem>>
    %123 = vector.broadcast %122 : f32 to vector<16x16xf32>
    %124 = arith.mulf %121, %123 : vector<16x16xf32>
    %125 = arith.addf %100, %124 : vector<16x16xf32>
    %126 = vector.extract_strided_slice %107 {offsets = [3, 0, 0], sizes = [1, 16, 16], strides = [1, 1, 1]} : vector<4x16x16xf32> to vector<1x16x16xf32>
    %127 = vector.shape_cast %126 : vector<1x16x16xf32> to vector<16x16xf32>
    %c19 = arith.constant 19 : index
    %128 = memref.load %arg2[%c19] : memref<36xf32, #tpu.memory_space<smem>>
    %129 = vector.broadcast %128 : f32 to vector<16x16xf32>
    %130 = arith.mulf %127, %129 : vector<16x16xf32>
    %131 = arith.addf %106, %130 : vector<16x16xf32>
    %c0_37 = arith.constant 0 : index
    %c1_38 = arith.constant 1 : index
    %c2_39 = arith.constant 2 : index
    %132 = vector.load %arg6[%c0_37, %c1_38, %c2_39] : memref<4x18x18xf32, #tpu.memory_space<vmem>>, vector<4x16x16xf32>
    %133 = vector.extract_strided_slice %132 {offsets = [0, 0, 0], sizes = [1, 16, 16], strides = [1, 1, 1]} : vector<4x16x16xf32> to vector<1x16x16xf32>
    %134 = vector.shape_cast %133 : vector<1x16x16xf32> to vector<16x16xf32>
    %c20 = arith.constant 20 : index
    %135 = memref.load %arg2[%c20] : memref<36xf32, #tpu.memory_space<smem>>
    %136 = vector.broadcast %135 : f32 to vector<16x16xf32>
    %137 = arith.mulf %134, %136 : vector<16x16xf32>
    %138 = arith.addf %113, %137 : vector<16x16xf32>
    %139 = vector.extract_strided_slice %132 {offsets = [1, 0, 0], sizes = [1, 16, 16], strides = [1, 1, 1]} : vector<4x16x16xf32> to vector<1x16x16xf32>
    %140 = vector.shape_cast %139 : vector<1x16x16xf32> to vector<16x16xf32>
    %c21 = arith.constant 21 : index
    %141 = memref.load %arg2[%c21] : memref<36xf32, #tpu.memory_space<smem>>
    %142 = vector.broadcast %141 : f32 to vector<16x16xf32>
    %143 = arith.mulf %140, %142 : vector<16x16xf32>
    %144 = arith.addf %119, %143 : vector<16x16xf32>
    %145 = vector.extract_strided_slice %132 {offsets = [2, 0, 0], sizes = [1, 16, 16], strides = [1, 1, 1]} : vector<4x16x16xf32> to vector<1x16x16xf32>
    %146 = vector.shape_cast %145 : vector<1x16x16xf32> to vector<16x16xf32>
    %c22 = arith.constant 22 : index
    %147 = memref.load %arg2[%c22] : memref<36xf32, #tpu.memory_space<smem>>
    %148 = vector.broadcast %147 : f32 to vector<16x16xf32>
    %149 = arith.mulf %146, %148 : vector<16x16xf32>
    %150 = arith.addf %125, %149 : vector<16x16xf32>
    %151 = vector.extract_strided_slice %132 {offsets = [3, 0, 0], sizes = [1, 16, 16], strides = [1, 1, 1]} : vector<4x16x16xf32> to vector<1x16x16xf32>
    %152 = vector.shape_cast %151 : vector<1x16x16xf32> to vector<16x16xf32>
    %c23 = arith.constant 23 : index
    %153 = memref.load %arg2[%c23] : memref<36xf32, #tpu.memory_space<smem>>
    %154 = vector.broadcast %153 : f32 to vector<16x16xf32>
    %155 = arith.mulf %152, %154 : vector<16x16xf32>
    %156 = arith.addf %131, %155 : vector<16x16xf32>
    %c0_40 = arith.constant 0 : index
    %c2_41 = arith.constant 2 : index
    %c0_42 = arith.constant 0 : index
    %157 = vector.load %arg6[%c0_40, %c2_41, %c0_42] : memref<4x18x18xf32, #tpu.memory_space<vmem>>, vector<4x16x16xf32>
    %158 = vector.extract_strided_slice %157 {offsets = [0, 0, 0], sizes = [1, 16, 16], strides = [1, 1, 1]} : vector<4x16x16xf32> to vector<1x16x16xf32>
    %159 = vector.shape_cast %158 : vector<1x16x16xf32> to vector<16x16xf32>
    %c24 = arith.constant 24 : index
    %160 = memref.load %arg2[%c24] : memref<36xf32, #tpu.memory_space<smem>>
    %161 = vector.broadcast %160 : f32 to vector<16x16xf32>
    %162 = arith.mulf %159, %161 : vector<16x16xf32>
    %163 = arith.addf %138, %162 : vector<16x16xf32>
    %164 = vector.extract_strided_slice %157 {offsets = [1, 0, 0], sizes = [1, 16, 16], strides = [1, 1, 1]} : vector<4x16x16xf32> to vector<1x16x16xf32>
    %165 = vector.shape_cast %164 : vector<1x16x16xf32> to vector<16x16xf32>
    %c25 = arith.constant 25 : index
    %166 = memref.load %arg2[%c25] : memref<36xf32, #tpu.memory_space<smem>>
    %167 = vector.broadcast %166 : f32 to vector<16x16xf32>
    %168 = arith.mulf %165, %167 : vector<16x16xf32>
    %169 = arith.addf %144, %168 : vector<16x16xf32>
    %170 = vector.extract_strided_slice %157 {offsets = [2, 0, 0], sizes = [1, 16, 16], strides = [1, 1, 1]} : vector<4x16x16xf32> to vector<1x16x16xf32>
    %171 = vector.shape_cast %170 : vector<1x16x16xf32> to vector<16x16xf32>
    %c26 = arith.constant 26 : index
    %172 = memref.load %arg2[%c26] : memref<36xf32, #tpu.memory_space<smem>>
    %173 = vector.broadcast %172 : f32 to vector<16x16xf32>
    %174 = arith.mulf %171, %173 : vector<16x16xf32>
    %175 = arith.addf %150, %174 : vector<16x16xf32>
    %176 = vector.extract_strided_slice %157 {offsets = [3, 0, 0], sizes = [1, 16, 16], strides = [1, 1, 1]} : vector<4x16x16xf32> to vector<1x16x16xf32>
    %177 = vector.shape_cast %176 : vector<1x16x16xf32> to vector<16x16xf32>
    %c27 = arith.constant 27 : index
    %178 = memref.load %arg2[%c27] : memref<36xf32, #tpu.memory_space<smem>>
    %179 = vector.broadcast %178 : f32 to vector<16x16xf32>
    %180 = arith.mulf %177, %179 : vector<16x16xf32>
    %181 = arith.addf %156, %180 : vector<16x16xf32>
    %c0_43 = arith.constant 0 : index
    %c2_44 = arith.constant 2 : index
    %c1_45 = arith.constant 1 : index
    %182 = vector.load %arg6[%c0_43, %c2_44, %c1_45] : memref<4x18x18xf32, #tpu.memory_space<vmem>>, vector<4x16x16xf32>
    %183 = vector.extract_strided_slice %182 {offsets = [0, 0, 0], sizes = [1, 16, 16], strides = [1, 1, 1]} : vector<4x16x16xf32> to vector<1x16x16xf32>
    %184 = vector.shape_cast %183 : vector<1x16x16xf32> to vector<16x16xf32>
    %c28 = arith.constant 28 : index
    %185 = memref.load %arg2[%c28] : memref<36xf32, #tpu.memory_space<smem>>
    %186 = vector.broadcast %185 : f32 to vector<16x16xf32>
    %187 = arith.mulf %184, %186 : vector<16x16xf32>
    %188 = arith.addf %163, %187 : vector<16x16xf32>
    %189 = vector.extract_strided_slice %182 {offsets = [1, 0, 0], sizes = [1, 16, 16], strides = [1, 1, 1]} : vector<4x16x16xf32> to vector<1x16x16xf32>
    %190 = vector.shape_cast %189 : vector<1x16x16xf32> to vector<16x16xf32>
    %c29 = arith.constant 29 : index
    %191 = memref.load %arg2[%c29] : memref<36xf32, #tpu.memory_space<smem>>
    %192 = vector.broadcast %191 : f32 to vector<16x16xf32>
    %193 = arith.mulf %190, %192 : vector<16x16xf32>
    %194 = arith.addf %169, %193 : vector<16x16xf32>
    %195 = vector.extract_strided_slice %182 {offsets = [2, 0, 0], sizes = [1, 16, 16], strides = [1, 1, 1]} : vector<4x16x16xf32> to vector<1x16x16xf32>
    %196 = vector.shape_cast %195 : vector<1x16x16xf32> to vector<16x16xf32>
    %c30 = arith.constant 30 : index
    %197 = memref.load %arg2[%c30] : memref<36xf32, #tpu.memory_space<smem>>
    %198 = vector.broadcast %197 : f32 to vector<16x16xf32>
    %199 = arith.mulf %196, %198 : vector<16x16xf32>
    %200 = arith.addf %175, %199 : vector<16x16xf32>
    %201 = vector.extract_strided_slice %182 {offsets = [3, 0, 0], sizes = [1, 16, 16], strides = [1, 1, 1]} : vector<4x16x16xf32> to vector<1x16x16xf32>
    %202 = vector.shape_cast %201 : vector<1x16x16xf32> to vector<16x16xf32>
    %c31 = arith.constant 31 : index
    %203 = memref.load %arg2[%c31] : memref<36xf32, #tpu.memory_space<smem>>
    %204 = vector.broadcast %203 : f32 to vector<16x16xf32>
    %205 = arith.mulf %202, %204 : vector<16x16xf32>
    %206 = arith.addf %181, %205 : vector<16x16xf32>
    %c0_46 = arith.constant 0 : index
    %c2_47 = arith.constant 2 : index
    %c2_48 = arith.constant 2 : index
    %207 = vector.load %arg6[%c0_46, %c2_47, %c2_48] : memref<4x18x18xf32, #tpu.memory_space<vmem>>, vector<4x16x16xf32>
    %208 = vector.extract_strided_slice %207 {offsets = [0, 0, 0], sizes = [1, 16, 16], strides = [1, 1, 1]} : vector<4x16x16xf32> to vector<1x16x16xf32>
    %209 = vector.shape_cast %208 : vector<1x16x16xf32> to vector<16x16xf32>
    %c32 = arith.constant 32 : index
    %210 = memref.load %arg2[%c32] : memref<36xf32, #tpu.memory_space<smem>>
    %211 = vector.broadcast %210 : f32 to vector<16x16xf32>
    %212 = arith.mulf %209, %211 : vector<16x16xf32>
    %213 = arith.addf %188, %212 : vector<16x16xf32>
    %214 = vector.extract_strided_slice %207 {offsets = [1, 0, 0], sizes = [1, 16, 16], strides = [1, 1, 1]} : vector<4x16x16xf32> to vector<1x16x16xf32>
    %215 = vector.shape_cast %214 : vector<1x16x16xf32> to vector<16x16xf32>
    %c33 = arith.constant 33 : index
    %216 = memref.load %arg2[%c33] : memref<36xf32, #tpu.memory_space<smem>>
    %217 = vector.broadcast %216 : f32 to vector<16x16xf32>
    %218 = arith.mulf %215, %217 : vector<16x16xf32>
    %219 = arith.addf %194, %218 : vector<16x16xf32>
    %220 = vector.extract_strided_slice %207 {offsets = [2, 0, 0], sizes = [1, 16, 16], strides = [1, 1, 1]} : vector<4x16x16xf32> to vector<1x16x16xf32>
    %221 = vector.shape_cast %220 : vector<1x16x16xf32> to vector<16x16xf32>
    %c34 = arith.constant 34 : index
    %222 = memref.load %arg2[%c34] : memref<36xf32, #tpu.memory_space<smem>>
    %223 = vector.broadcast %222 : f32 to vector<16x16xf32>
    %224 = arith.mulf %221, %223 : vector<16x16xf32>
    %225 = arith.addf %200, %224 : vector<16x16xf32>
    %226 = vector.extract_strided_slice %207 {offsets = [3, 0, 0], sizes = [1, 16, 16], strides = [1, 1, 1]} : vector<4x16x16xf32> to vector<1x16x16xf32>
    %227 = vector.shape_cast %226 : vector<1x16x16xf32> to vector<16x16xf32>
    %c35 = arith.constant 35 : index
    %228 = memref.load %arg2[%c35] : memref<36xf32, #tpu.memory_space<smem>>
    %229 = vector.broadcast %228 : f32 to vector<16x16xf32>
    %230 = arith.mulf %227, %229 : vector<16x16xf32>
    %231 = arith.addf %206, %230 : vector<16x16xf32>
    %c0_49 = arith.constant 0 : index
    %232 = memref.load %arg3[%c0_49] : memref<16xf32, #tpu.memory_space<smem>>
    %233 = vector.broadcast %232 : f32 to vector<16x16xf32>
    %234 = arith.mulf %213, %233 : vector<16x16xf32>
    %c1_50 = arith.constant 1 : index
    %235 = memref.load %arg3[%c1_50] : memref<16xf32, #tpu.memory_space<smem>>
    %236 = vector.broadcast %235 : f32 to vector<16x16xf32>
    %237 = arith.mulf %219, %236 : vector<16x16xf32>
    %238 = arith.addf %234, %237 : vector<16x16xf32>
    %c2_51 = arith.constant 2 : index
    %239 = memref.load %arg3[%c2_51] : memref<16xf32, #tpu.memory_space<smem>>
    %240 = vector.broadcast %239 : f32 to vector<16x16xf32>
    %241 = arith.mulf %225, %240 : vector<16x16xf32>
    %242 = arith.addf %238, %241 : vector<16x16xf32>
    %c3_52 = arith.constant 3 : index
    %243 = memref.load %arg3[%c3_52] : memref<16xf32, #tpu.memory_space<smem>>
    %244 = vector.broadcast %243 : f32 to vector<16x16xf32>
    %245 = arith.mulf %231, %244 : vector<16x16xf32>
    %246 = arith.addf %242, %245 : vector<16x16xf32>
    %c0_53 = arith.constant 0 : index
    %247 = memref.load %arg4[%c0_53] : memref<4xf32, #tpu.memory_space<smem>>
    %248 = vector.broadcast %247 : f32 to vector<16x16xf32>
    %249 = arith.addf %246, %248 : vector<16x16xf32>
    %c4_54 = arith.constant 4 : index
    %250 = memref.load %arg3[%c4_54] : memref<16xf32, #tpu.memory_space<smem>>
    %251 = vector.broadcast %250 : f32 to vector<16x16xf32>
    %252 = arith.mulf %213, %251 : vector<16x16xf32>
    %c5_55 = arith.constant 5 : index
    %253 = memref.load %arg3[%c5_55] : memref<16xf32, #tpu.memory_space<smem>>
    %254 = vector.broadcast %253 : f32 to vector<16x16xf32>
    %255 = arith.mulf %219, %254 : vector<16x16xf32>
    %256 = arith.addf %252, %255 : vector<16x16xf32>
    %c6_56 = arith.constant 6 : index
    %257 = memref.load %arg3[%c6_56] : memref<16xf32, #tpu.memory_space<smem>>
    %258 = vector.broadcast %257 : f32 to vector<16x16xf32>
    %259 = arith.mulf %225, %258 : vector<16x16xf32>
    %260 = arith.addf %256, %259 : vector<16x16xf32>
    %c7_57 = arith.constant 7 : index
    %261 = memref.load %arg3[%c7_57] : memref<16xf32, #tpu.memory_space<smem>>
    %262 = vector.broadcast %261 : f32 to vector<16x16xf32>
    %263 = arith.mulf %231, %262 : vector<16x16xf32>
    %264 = arith.addf %260, %263 : vector<16x16xf32>
    %c1_58 = arith.constant 1 : index
    %265 = memref.load %arg4[%c1_58] : memref<4xf32, #tpu.memory_space<smem>>
    %266 = vector.broadcast %265 : f32 to vector<16x16xf32>
    %267 = arith.addf %264, %266 : vector<16x16xf32>
    %c8_59 = arith.constant 8 : index
    %268 = memref.load %arg3[%c8_59] : memref<16xf32, #tpu.memory_space<smem>>
    %269 = vector.broadcast %268 : f32 to vector<16x16xf32>
    %270 = arith.mulf %213, %269 : vector<16x16xf32>
    %c9_60 = arith.constant 9 : index
    %271 = memref.load %arg3[%c9_60] : memref<16xf32, #tpu.memory_space<smem>>
    %272 = vector.broadcast %271 : f32 to vector<16x16xf32>
    %273 = arith.mulf %219, %272 : vector<16x16xf32>
    %274 = arith.addf %270, %273 : vector<16x16xf32>
    %c10_61 = arith.constant 10 : index
    %275 = memref.load %arg3[%c10_61] : memref<16xf32, #tpu.memory_space<smem>>
    %276 = vector.broadcast %275 : f32 to vector<16x16xf32>
    %277 = arith.mulf %225, %276 : vector<16x16xf32>
    %278 = arith.addf %274, %277 : vector<16x16xf32>
    %c11_62 = arith.constant 11 : index
    %279 = memref.load %arg3[%c11_62] : memref<16xf32, #tpu.memory_space<smem>>
    %280 = vector.broadcast %279 : f32 to vector<16x16xf32>
    %281 = arith.mulf %231, %280 : vector<16x16xf32>
    %282 = arith.addf %278, %281 : vector<16x16xf32>
    %c2_63 = arith.constant 2 : index
    %283 = memref.load %arg4[%c2_63] : memref<4xf32, #tpu.memory_space<smem>>
    %284 = vector.broadcast %283 : f32 to vector<16x16xf32>
    %285 = arith.addf %282, %284 : vector<16x16xf32>
    %c12_64 = arith.constant 12 : index
    %286 = memref.load %arg3[%c12_64] : memref<16xf32, #tpu.memory_space<smem>>
    %287 = vector.broadcast %286 : f32 to vector<16x16xf32>
    %288 = arith.mulf %213, %287 : vector<16x16xf32>
    %c13_65 = arith.constant 13 : index
    %289 = memref.load %arg3[%c13_65] : memref<16xf32, #tpu.memory_space<smem>>
    %290 = vector.broadcast %289 : f32 to vector<16x16xf32>
    %291 = arith.mulf %219, %290 : vector<16x16xf32>
    %292 = arith.addf %288, %291 : vector<16x16xf32>
    %c14_66 = arith.constant 14 : index
    %293 = memref.load %arg3[%c14_66] : memref<16xf32, #tpu.memory_space<smem>>
    %294 = vector.broadcast %293 : f32 to vector<16x16xf32>
    %295 = arith.mulf %225, %294 : vector<16x16xf32>
    %296 = arith.addf %292, %295 : vector<16x16xf32>
    %c15_67 = arith.constant 15 : index
    %297 = memref.load %arg3[%c15_67] : memref<16xf32, #tpu.memory_space<smem>>
    %298 = vector.broadcast %297 : f32 to vector<16x16xf32>
    %299 = arith.mulf %231, %298 : vector<16x16xf32>
    %300 = arith.addf %296, %299 : vector<16x16xf32>
    %c3_68 = arith.constant 3 : index
    %301 = memref.load %arg4[%c3_68] : memref<4xf32, #tpu.memory_space<smem>>
    %302 = vector.broadcast %301 : f32 to vector<16x16xf32>
    %303 = arith.addf %300, %302 : vector<16x16xf32>
    %cst_69 = arith.constant 0.000000e+00 : f32
    %304 = vector.broadcast %cst_69 : f32 to vector<16x16xf32>
    %305 = arith.maximumf %249, %304 : vector<16x16xf32>
    %c0_70 = arith.constant 0 : index
    %c1_71 = arith.constant 1 : index
    %c1_72 = arith.constant 1 : index
    %306 = vector.load %arg6[%c0_70, %c1_71, %c1_72] : memref<4x18x18xf32, #tpu.memory_space<vmem>>, vector<1x16x16xf32>
    %307 = vector.shape_cast %306 : vector<1x16x16xf32> to vector<16x16xf32>
    %308 = vector.shape_cast %305 : vector<16x16xf32> to vector<1x16x16xf32>
    tpu.vector_store %arg6[%c0_70, %c1_71, %c1_72], %308 {strides = array<i32>} : memref<4x18x18xf32, #tpu.memory_space<vmem>>, vector<1x16x16xf32>,
    %cst_73 = arith.constant 0.000000e+00 : f32
    %309 = vector.broadcast %cst_73 : f32 to vector<16x16xf32>
    %310 = arith.maximumf %267, %309 : vector<16x16xf32>
    %c1_74 = arith.constant 1 : index
    %c1_75 = arith.constant 1 : index
    %c1_76 = arith.constant 1 : index
    %311 = vector.load %arg6[%c1_74, %c1_75, %c1_76] : memref<4x18x18xf32, #tpu.memory_space<vmem>>, vector<1x16x16xf32>
    %312 = vector.shape_cast %311 : vector<1x16x16xf32> to vector<16x16xf32>
    %313 = vector.shape_cast %310 : vector<16x16xf32> to vector<1x16x16xf32>
    tpu.vector_store %arg6[%c1_74, %c1_75, %c1_76], %313 {strides = array<i32>} : memref<4x18x18xf32, #tpu.memory_space<vmem>>, vector<1x16x16xf32>,
    %cst_77 = arith.constant 0.000000e+00 : f32
    %314 = vector.broadcast %cst_77 : f32 to vector<16x16xf32>
    %315 = arith.maximumf %285, %314 : vector<16x16xf32>
    %c2_78 = arith.constant 2 : index
    %c1_79 = arith.constant 1 : index
    %c1_80 = arith.constant 1 : index
    %316 = vector.load %arg6[%c2_78, %c1_79, %c1_80] : memref<4x18x18xf32, #tpu.memory_space<vmem>>, vector<1x16x16xf32>
    %317 = vector.shape_cast %316 : vector<1x16x16xf32> to vector<16x16xf32>
    %318 = vector.shape_cast %315 : vector<16x16xf32> to vector<1x16x16xf32>
    tpu.vector_store %arg6[%c2_78, %c1_79, %c1_80], %318 {strides = array<i32>} : memref<4x18x18xf32, #tpu.memory_space<vmem>>, vector<1x16x16xf32>,
    %cst_81 = arith.constant 0.000000e+00 : f32
    %319 = vector.broadcast %cst_81 : f32 to vector<16x16xf32>
    %320 = arith.maximumf %303, %319 : vector<16x16xf32>
    %c3_82 = arith.constant 3 : index
    %c1_83 = arith.constant 1 : index
    %c1_84 = arith.constant 1 : index
    %321 = vector.load %arg6[%c3_82, %c1_83, %c1_84] : memref<4x18x18xf32, #tpu.memory_space<vmem>>, vector<1x16x16xf32>
    %322 = vector.shape_cast %321 : vector<1x16x16xf32> to vector<16x16xf32>
    %323 = vector.shape_cast %320 : vector<16x16xf32> to vector<1x16x16xf32>
    tpu.vector_store %arg6[%c3_82, %c1_83, %c1_84], %323 {strides = array<i32>} : memref<4x18x18xf32, #tpu.memory_space<vmem>>, vector<1x16x16xf32>,
    %c0_85 = arith.constant 0 : index
    %c0_86 = arith.constant 0 : index
    %c0_87 = arith.constant 0 : index
    %324 = vector.load %arg6[%c0_85, %c0_86, %c0_87] : memref<4x18x18xf32, #tpu.memory_space<vmem>>, vector<4x16x16xf32>
    %325 = vector.extract_strided_slice %324 {offsets = [0, 0, 0], sizes = [1, 16, 16], strides = [1, 1, 1]} : vector<4x16x16xf32> to vector<1x16x16xf32>
    %326 = vector.shape_cast %325 : vector<1x16x16xf32> to vector<16x16xf32>
    %c0_88 = arith.constant 0 : index
    %327 = memref.load %arg2[%c0_88] : memref<36xf32, #tpu.memory_space<smem>>
    %328 = vector.broadcast %327 : f32 to vector<16x16xf32>
    %329 = arith.mulf %326, %328 : vector<16x16xf32>
    %330 = vector.extract_strided_slice %324 {offsets = [1, 0, 0], sizes = [1, 16, 16], strides = [1, 1, 1]} : vector<4x16x16xf32> to vector<1x16x16xf32>
    %331 = vector.shape_cast %330 : vector<1x16x16xf32> to vector<16x16xf32>
    %c1_89 = arith.constant 1 : index
    %332 = memref.load %arg2[%c1_89] : memref<36xf32, #tpu.memory_space<smem>>
    %333 = vector.broadcast %332 : f32 to vector<16x16xf32>
    %334 = arith.mulf %331, %333 : vector<16x16xf32>
    %335 = vector.extract_strided_slice %324 {offsets = [2, 0, 0], sizes = [1, 16, 16], strides = [1, 1, 1]} : vector<4x16x16xf32> to vector<1x16x16xf32>
    %336 = vector.shape_cast %335 : vector<1x16x16xf32> to vector<16x16xf32>
    %c2_90 = arith.constant 2 : index
    %337 = memref.load %arg2[%c2_90] : memref<36xf32, #tpu.memory_space<smem>>
    %338 = vector.broadcast %337 : f32 to vector<16x16xf32>
    %339 = arith.mulf %336, %338 : vector<16x16xf32>
    %340 = vector.extract_strided_slice %324 {offsets = [3, 0, 0], sizes = [1, 16, 16], strides = [1, 1, 1]} : vector<4x16x16xf32> to vector<1x16x16xf32>
    %341 = vector.shape_cast %340 : vector<1x16x16xf32> to vector<16x16xf32>
    %c3_91 = arith.constant 3 : index
    %342 = memref.load %arg2[%c3_91] : memref<36xf32, #tpu.memory_space<smem>>
    %343 = vector.broadcast %342 : f32 to vector<16x16xf32>
    %344 = arith.mulf %341, %343 : vector<16x16xf32>
    %c0_92 = arith.constant 0 : index
    %c0_93 = arith.constant 0 : index
    %c1_94 = arith.constant 1 : index
    %345 = vector.load %arg6[%c0_92, %c0_93, %c1_94] : memref<4x18x18xf32, #tpu.memory_space<vmem>>, vector<4x16x16xf32>
    %346 = vector.extract_strided_slice %345 {offsets = [0, 0, 0], sizes = [1, 16, 16], strides = [1, 1, 1]} : vector<4x16x16xf32> to vector<1x16x16xf32>
    %347 = vector.shape_cast %346 : vector<1x16x16xf32> to vector<16x16xf32>
    %c4_95 = arith.constant 4 : index
    %348 = memref.load %arg2[%c4_95] : memref<36xf32, #tpu.memory_space<smem>>
    %349 = vector.broadcast %348 : f32 to vector<16x16xf32>
    %350 = arith.mulf %347, %349 : vector<16x16xf32>
    %351 = arith.addf %329, %350 : vector<16x16xf32>
    %352 = vector.extract_strided_slice %345 {offsets = [1, 0, 0], sizes = [1, 16, 16], strides = [1, 1, 1]} : vector<4x16x16xf32> to vector<1x16x16xf32>
    %353 = vector.shape_cast %352 : vector<1x16x16xf32> to vector<16x16xf32>
    %c5_96 = arith.constant 5 : index
    %354 = memref.load %arg2[%c5_96] : memref<36xf32, #tpu.memory_space<smem>>
    %355 = vector.broadcast %354 : f32 to vector<16x16xf32>
    %356 = arith.mulf %353, %355 : vector<16x16xf32>
    %357 = arith.addf %334, %356 : vector<16x16xf32>
    %358 = vector.extract_strided_slice %345 {offsets = [2, 0, 0], sizes = [1, 16, 16], strides = [1, 1, 1]} : vector<4x16x16xf32> to vector<1x16x16xf32>
    %359 = vector.shape_cast %358 : vector<1x16x16xf32> to vector<16x16xf32>
    %c6_97 = arith.constant 6 : index
    %360 = memref.load %arg2[%c6_97] : memref<36xf32, #tpu.memory_space<smem>>
    %361 = vector.broadcast %360 : f32 to vector<16x16xf32>
    %362 = arith.mulf %359, %361 : vector<16x16xf32>
    %363 = arith.addf %339, %362 : vector<16x16xf32>
    %364 = vector.extract_strided_slice %345 {offsets = [3, 0, 0], sizes = [1, 16, 16], strides = [1, 1, 1]} : vector<4x16x16xf32> to vector<1x16x16xf32>
    %365 = vector.shape_cast %364 : vector<1x16x16xf32> to vector<16x16xf32>
    %c7_98 = arith.constant 7 : index
    %366 = memref.load %arg2[%c7_98] : memref<36xf32, #tpu.memory_space<smem>>
    %367 = vector.broadcast %366 : f32 to vector<16x16xf32>
    %368 = arith.mulf %365, %367 : vector<16x16xf32>
    %369 = arith.addf %344, %368 : vector<16x16xf32>
    %c0_99 = arith.constant 0 : index
    %c0_100 = arith.constant 0 : index
    %c2_101 = arith.constant 2 : index
    %370 = vector.load %arg6[%c0_99, %c0_100, %c2_101] : memref<4x18x18xf32, #tpu.memory_space<vmem>>, vector<4x16x16xf32>
    %371 = vector.extract_strided_slice %370 {offsets = [0, 0, 0], sizes = [1, 16, 16], strides = [1, 1, 1]} : vector<4x16x16xf32> to vector<1x16x16xf32>
    %372 = vector.shape_cast %371 : vector<1x16x16xf32> to vector<16x16xf32>
    %c8_102 = arith.constant 8 : index
    %373 = memref.load %arg2[%c8_102] : memref<36xf32, #tpu.memory_space<smem>>
    %374 = vector.broadcast %373 : f32 to vector<16x16xf32>
    %375 = arith.mulf %372, %374 : vector<16x16xf32>
    %376 = arith.addf %351, %375 : vector<16x16xf32>
    %377 = vector.extract_strided_slice %370 {offsets = [1, 0, 0], sizes = [1, 16, 16], strides = [1, 1, 1]} : vector<4x16x16xf32> to vector<1x16x16xf32>
    %378 = vector.shape_cast %377 : vector<1x16x16xf32> to vector<16x16xf32>
    %c9_103 = arith.constant 9 : index
    %379 = memref.load %arg2[%c9_103] : memref<36xf32, #tpu.memory_space<smem>>
    %380 = vector.broadcast %379 : f32 to vector<16x16xf32>
    %381 = arith.mulf %378, %380 : vector<16x16xf32>
    %382 = arith.addf %357, %381 : vector<16x16xf32>
    %383 = vector.extract_strided_slice %370 {offsets = [2, 0, 0], sizes = [1, 16, 16], strides = [1, 1, 1]} : vector<4x16x16xf32> to vector<1x16x16xf32>
    %384 = vector.shape_cast %383 : vector<1x16x16xf32> to vector<16x16xf32>
    %c10_104 = arith.constant 10 : index
    %385 = memref.load %arg2[%c10_104] : memref<36xf32, #tpu.memory_space<smem>>
    %386 = vector.broadcast %385 : f32 to vector<16x16xf32>
    %387 = arith.mulf %384, %386 : vector<16x16xf32>
    %388 = arith.addf %363, %387 : vector<16x16xf32>
    %389 = vector.extract_strided_slice %370 {offsets = [3, 0, 0], sizes = [1, 16, 16], strides = [1, 1, 1]} : vector<4x16x16xf32> to vector<1x16x16xf32>
    %390 = vector.shape_cast %389 : vector<1x16x16xf32> to vector<16x16xf32>
    %c11_105 = arith.constant 11 : index
    %391 = memref.load %arg2[%c11_105] : memref<36xf32, #tpu.memory_space<smem>>
    %392 = vector.broadcast %391 : f32 to vector<16x16xf32>
    %393 = arith.mulf %390, %392 : vector<16x16xf32>
    %394 = arith.addf %369, %393 : vector<16x16xf32>
    %c0_106 = arith.constant 0 : index
    %c1_107 = arith.constant 1 : index
    %c0_108 = arith.constant 0 : index
    %395 = vector.load %arg6[%c0_106, %c1_107, %c0_108] : memref<4x18x18xf32, #tpu.memory_space<vmem>>, vector<4x16x16xf32>
    %396 = vector.extract_strided_slice %395 {offsets = [0, 0, 0], sizes = [1, 16, 16], strides = [1, 1, 1]} : vector<4x16x16xf32> to vector<1x16x16xf32>
    %397 = vector.shape_cast %396 : vector<1x16x16xf32> to vector<16x16xf32>
    %c12_109 = arith.constant 12 : index
    %398 = memref.load %arg2[%c12_109] : memref<36xf32, #tpu.memory_space<smem>>
    %399 = vector.broadcast %398 : f32 to vector<16x16xf32>
    %400 = arith.mulf %397, %399 : vector<16x16xf32>
    %401 = arith.addf %376, %400 : vector<16x16xf32>
    %402 = vector.extract_strided_slice %395 {offsets = [1, 0, 0], sizes = [1, 16, 16], strides = [1, 1, 1]} : vector<4x16x16xf32> to vector<1x16x16xf32>
    %403 = vector.shape_cast %402 : vector<1x16x16xf32> to vector<16x16xf32>
    %c13_110 = arith.constant 13 : index
    %404 = memref.load %arg2[%c13_110] : memref<36xf32, #tpu.memory_space<smem>>
    %405 = vector.broadcast %404 : f32 to vector<16x16xf32>
    %406 = arith.mulf %403, %405 : vector<16x16xf32>
    %407 = arith.addf %382, %406 : vector<16x16xf32>
    %408 = vector.extract_strided_slice %395 {offsets = [2, 0, 0], sizes = [1, 16, 16], strides = [1, 1, 1]} : vector<4x16x16xf32> to vector<1x16x16xf32>
    %409 = vector.shape_cast %408 : vector<1x16x16xf32> to vector<16x16xf32>
    %c14_111 = arith.constant 14 : index
    %410 = memref.load %arg2[%c14_111] : memref<36xf32, #tpu.memory_space<smem>>
    %411 = vector.broadcast %410 : f32 to vector<16x16xf32>
    %412 = arith.mulf %409, %411 : vector<16x16xf32>
    %413 = arith.addf %388, %412 : vector<16x16xf32>
    %414 = vector.extract_strided_slice %395 {offsets = [3, 0, 0], sizes = [1, 16, 16], strides = [1, 1, 1]} : vector<4x16x16xf32> to vector<1x16x16xf32>
    %415 = vector.shape_cast %414 : vector<1x16x16xf32> to vector<16x16xf32>
    %c15_112 = arith.constant 15 : index
    %416 = memref.load %arg2[%c15_112] : memref<36xf32, #tpu.memory_space<smem>>
    %417 = vector.broadcast %416 : f32 to vector<16x16xf32>
    %418 = arith.mulf %415, %417 : vector<16x16xf32>
    %419 = arith.addf %394, %418 : vector<16x16xf32>
    %c0_113 = arith.constant 0 : index
    %c1_114 = arith.constant 1 : index
    %c1_115 = arith.constant 1 : index
    %420 = vector.load %arg6[%c0_113, %c1_114, %c1_115] : memref<4x18x18xf32, #tpu.memory_space<vmem>>, vector<4x16x16xf32>
    %421 = vector.extract_strided_slice %420 {offsets = [0, 0, 0], sizes = [1, 16, 16], strides = [1, 1, 1]} : vector<4x16x16xf32> to vector<1x16x16xf32>
    %422 = vector.shape_cast %421 : vector<1x16x16xf32> to vector<16x16xf32>
    %c16_116 = arith.constant 16 : index
    %423 = memref.load %arg2[%c16_116] : memref<36xf32, #tpu.memory_space<smem>>
    %424 = vector.broadcast %423 : f32 to vector<16x16xf32>
    %425 = arith.mulf %422, %424 : vector<16x16xf32>
    %426 = arith.addf %401, %425 : vector<16x16xf32>
    %427 = vector.extract_strided_slice %420 {offsets = [1, 0, 0], sizes = [1, 16, 16], strides = [1, 1, 1]} : vector<4x16x16xf32> to vector<1x16x16xf32>
    %428 = vector.shape_cast %427 : vector<1x16x16xf32> to vector<16x16xf32>
    %c17_117 = arith.constant 17 : index
    %429 = memref.load %arg2[%c17_117] : memref<36xf32, #tpu.memory_space<smem>>
    %430 = vector.broadcast %429 : f32 to vector<16x16xf32>
    %431 = arith.mulf %428, %430 : vector<16x16xf32>
    %432 = arith.addf %407, %431 : vector<16x16xf32>
    %433 = vector.extract_strided_slice %420 {offsets = [2, 0, 0], sizes = [1, 16, 16], strides = [1, 1, 1]} : vector<4x16x16xf32> to vector<1x16x16xf32>
    %434 = vector.shape_cast %433 : vector<1x16x16xf32> to vector<16x16xf32>
    %c18_118 = arith.constant 18 : index
    %435 = memref.load %arg2[%c18_118] : memref<36xf32, #tpu.memory_space<smem>>
    %436 = vector.broadcast %435 : f32 to vector<16x16xf32>
    %437 = arith.mulf %434, %436 : vector<16x16xf32>
    %438 = arith.addf %413, %437 : vector<16x16xf32>
    %439 = vector.extract_strided_slice %420 {offsets = [3, 0, 0], sizes = [1, 16, 16], strides = [1, 1, 1]} : vector<4x16x16xf32> to vector<1x16x16xf32>
    %440 = vector.shape_cast %439 : vector<1x16x16xf32> to vector<16x16xf32>
    %c19_119 = arith.constant 19 : index
    %441 = memref.load %arg2[%c19_119] : memref<36xf32, #tpu.memory_space<smem>>
    %442 = vector.broadcast %441 : f32 to vector<16x16xf32>
    %443 = arith.mulf %440, %442 : vector<16x16xf32>
    %444 = arith.addf %419, %443 : vector<16x16xf32>
    %c0_120 = arith.constant 0 : index
    %c1_121 = arith.constant 1 : index
    %c2_122 = arith.constant 2 : index
    %445 = vector.load %arg6[%c0_120, %c1_121, %c2_122] : memref<4x18x18xf32, #tpu.memory_space<vmem>>, vector<4x16x16xf32>
    %446 = vector.extract_strided_slice %445 {offsets = [0, 0, 0], sizes = [1, 16, 16], strides = [1, 1, 1]} : vector<4x16x16xf32> to vector<1x16x16xf32>
    %447 = vector.shape_cast %446 : vector<1x16x16xf32> to vector<16x16xf32>
    %c20_123 = arith.constant 20 : index
    %448 = memref.load %arg2[%c20_123] : memref<36xf32, #tpu.memory_space<smem>>
    %449 = vector.broadcast %448 : f32 to vector<16x16xf32>
    %450 = arith.mulf %447, %449 : vector<16x16xf32>
    %451 = arith.addf %426, %450 : vector<16x16xf32>
    %452 = vector.extract_strided_slice %445 {offsets = [1, 0, 0], sizes = [1, 16, 16], strides = [1, 1, 1]} : vector<4x16x16xf32> to vector<1x16x16xf32>
    %453 = vector.shape_cast %452 : vector<1x16x16xf32> to vector<16x16xf32>
    %c21_124 = arith.constant 21 : index
    %454 = memref.load %arg2[%c21_124] : memref<36xf32, #tpu.memory_space<smem>>
    %455 = vector.broadcast %454 : f32 to vector<16x16xf32>
    %456 = arith.mulf %453, %455 : vector<16x16xf32>
    %457 = arith.addf %432, %456 : vector<16x16xf32>
    %458 = vector.extract_strided_slice %445 {offsets = [2, 0, 0], sizes = [1, 16, 16], strides = [1, 1, 1]} : vector<4x16x16xf32> to vector<1x16x16xf32>
    %459 = vector.shape_cast %458 : vector<1x16x16xf32> to vector<16x16xf32>
    %c22_125 = arith.constant 22 : index
    %460 = memref.load %arg2[%c22_125] : memref<36xf32, #tpu.memory_space<smem>>
    %461 = vector.broadcast %460 : f32 to vector<16x16xf32>
    %462 = arith.mulf %459, %461 : vector<16x16xf32>
    %463 = arith.addf %438, %462 : vector<16x16xf32>
    %464 = vector.extract_strided_slice %445 {offsets = [3, 0, 0], sizes = [1, 16, 16], strides = [1, 1, 1]} : vector<4x16x16xf32> to vector<1x16x16xf32>
    %465 = vector.shape_cast %464 : vector<1x16x16xf32> to vector<16x16xf32>
    %c23_126 = arith.constant 23 : index
    %466 = memref.load %arg2[%c23_126] : memref<36xf32, #tpu.memory_space<smem>>
    %467 = vector.broadcast %466 : f32 to vector<16x16xf32>
    %468 = arith.mulf %465, %467 : vector<16x16xf32>
    %469 = arith.addf %444, %468 : vector<16x16xf32>
    %c0_127 = arith.constant 0 : index
    %c2_128 = arith.constant 2 : index
    %c0_129 = arith.constant 0 : index
    %470 = vector.load %arg6[%c0_127, %c2_128, %c0_129] : memref<4x18x18xf32, #tpu.memory_space<vmem>>, vector<4x16x16xf32>
    %471 = vector.extract_strided_slice %470 {offsets = [0, 0, 0], sizes = [1, 16, 16], strides = [1, 1, 1]} : vector<4x16x16xf32> to vector<1x16x16xf32>
    %472 = vector.shape_cast %471 : vector<1x16x16xf32> to vector<16x16xf32>
    %c24_130 = arith.constant 24 : index
    %473 = memref.load %arg2[%c24_130] : memref<36xf32, #tpu.memory_space<smem>>
    %474 = vector.broadcast %473 : f32 to vector<16x16xf32>
    %475 = arith.mulf %472, %474 : vector<16x16xf32>
    %476 = arith.addf %451, %475 : vector<16x16xf32>
    %477 = vector.extract_strided_slice %470 {offsets = [1, 0, 0], sizes = [1, 16, 16], strides = [1, 1, 1]} : vector<4x16x16xf32> to vector<1x16x16xf32>
    %478 = vector.shape_cast %477 : vector<1x16x16xf32> to vector<16x16xf32>
    %c25_131 = arith.constant 25 : index
    %479 = memref.load %arg2[%c25_131] : memref<36xf32, #tpu.memory_space<smem>>
    %480 = vector.broadcast %479 : f32 to vector<16x16xf32>
    %481 = arith.mulf %478, %480 : vector<16x16xf32>
    %482 = arith.addf %457, %481 : vector<16x16xf32>
    %483 = vector.extract_strided_slice %470 {offsets = [2, 0, 0], sizes = [1, 16, 16], strides = [1, 1, 1]} : vector<4x16x16xf32> to vector<1x16x16xf32>
    %484 = vector.shape_cast %483 : vector<1x16x16xf32> to vector<16x16xf32>
    %c26_132 = arith.constant 26 : index
    %485 = memref.load %arg2[%c26_132] : memref<36xf32, #tpu.memory_space<smem>>
    %486 = vector.broadcast %485 : f32 to vector<16x16xf32>
    %487 = arith.mulf %484, %486 : vector<16x16xf32>
    %488 = arith.addf %463, %487 : vector<16x16xf32>
    %489 = vector.extract_strided_slice %470 {offsets = [3, 0, 0], sizes = [1, 16, 16], strides = [1, 1, 1]} : vector<4x16x16xf32> to vector<1x16x16xf32>
    %490 = vector.shape_cast %489 : vector<1x16x16xf32> to vector<16x16xf32>
    %c27_133 = arith.constant 27 : index
    %491 = memref.load %arg2[%c27_133] : memref<36xf32, #tpu.memory_space<smem>>
    %492 = vector.broadcast %491 : f32 to vector<16x16xf32>
    %493 = arith.mulf %490, %492 : vector<16x16xf32>
    %494 = arith.addf %469, %493 : vector<16x16xf32>
    %c0_134 = arith.constant 0 : index
    %c2_135 = arith.constant 2 : index
    %c1_136 = arith.constant 1 : index
    %495 = vector.load %arg6[%c0_134, %c2_135, %c1_136] : memref<4x18x18xf32, #tpu.memory_space<vmem>>, vector<4x16x16xf32>
    %496 = vector.extract_strided_slice %495 {offsets = [0, 0, 0], sizes = [1, 16, 16], strides = [1, 1, 1]} : vector<4x16x16xf32> to vector<1x16x16xf32>
    %497 = vector.shape_cast %496 : vector<1x16x16xf32> to vector<16x16xf32>
    %c28_137 = arith.constant 28 : index
    %498 = memref.load %arg2[%c28_137] : memref<36xf32, #tpu.memory_space<smem>>
    %499 = vector.broadcast %498 : f32 to vector<16x16xf32>
    %500 = arith.mulf %497, %499 : vector<16x16xf32>
    %501 = arith.addf %476, %500 : vector<16x16xf32>
    %502 = vector.extract_strided_slice %495 {offsets = [1, 0, 0], sizes = [1, 16, 16], strides = [1, 1, 1]} : vector<4x16x16xf32> to vector<1x16x16xf32>
    %503 = vector.shape_cast %502 : vector<1x16x16xf32> to vector<16x16xf32>
    %c29_138 = arith.constant 29 : index
    %504 = memref.load %arg2[%c29_138] : memref<36xf32, #tpu.memory_space<smem>>
    %505 = vector.broadcast %504 : f32 to vector<16x16xf32>
    %506 = arith.mulf %503, %505 : vector<16x16xf32>
    %507 = arith.addf %482, %506 : vector<16x16xf32>
    %508 = vector.extract_strided_slice %495 {offsets = [2, 0, 0], sizes = [1, 16, 16], strides = [1, 1, 1]} : vector<4x16x16xf32> to vector<1x16x16xf32>
    %509 = vector.shape_cast %508 : vector<1x16x16xf32> to vector<16x16xf32>
    %c30_139 = arith.constant 30 : index
    %510 = memref.load %arg2[%c30_139] : memref<36xf32, #tpu.memory_space<smem>>
    %511 = vector.broadcast %510 : f32 to vector<16x16xf32>
    %512 = arith.mulf %509, %511 : vector<16x16xf32>
    %513 = arith.addf %488, %512 : vector<16x16xf32>
    %514 = vector.extract_strided_slice %495 {offsets = [3, 0, 0], sizes = [1, 16, 16], strides = [1, 1, 1]} : vector<4x16x16xf32> to vector<1x16x16xf32>
    %515 = vector.shape_cast %514 : vector<1x16x16xf32> to vector<16x16xf32>
    %c31_140 = arith.constant 31 : index
    %516 = memref.load %arg2[%c31_140] : memref<36xf32, #tpu.memory_space<smem>>
    %517 = vector.broadcast %516 : f32 to vector<16x16xf32>
    %518 = arith.mulf %515, %517 : vector<16x16xf32>
    %519 = arith.addf %494, %518 : vector<16x16xf32>
    %c0_141 = arith.constant 0 : index
    %c2_142 = arith.constant 2 : index
    %c2_143 = arith.constant 2 : index
    %520 = vector.load %arg6[%c0_141, %c2_142, %c2_143] : memref<4x18x18xf32, #tpu.memory_space<vmem>>, vector<4x16x16xf32>
    %521 = vector.extract_strided_slice %520 {offsets = [0, 0, 0], sizes = [1, 16, 16], strides = [1, 1, 1]} : vector<4x16x16xf32> to vector<1x16x16xf32>
    %522 = vector.shape_cast %521 : vector<1x16x16xf32> to vector<16x16xf32>
    %c32_144 = arith.constant 32 : index
    %523 = memref.load %arg2[%c32_144] : memref<36xf32, #tpu.memory_space<smem>>
    %524 = vector.broadcast %523 : f32 to vector<16x16xf32>
    %525 = arith.mulf %522, %524 : vector<16x16xf32>
    %526 = arith.addf %501, %525 : vector<16x16xf32>
    %527 = vector.extract_strided_slice %520 {offsets = [1, 0, 0], sizes = [1, 16, 16], strides = [1, 1, 1]} : vector<4x16x16xf32> to vector<1x16x16xf32>
    %528 = vector.shape_cast %527 : vector<1x16x16xf32> to vector<16x16xf32>
    %c33_145 = arith.constant 33 : index
    %529 = memref.load %arg2[%c33_145] : memref<36xf32, #tpu.memory_space<smem>>
    %530 = vector.broadcast %529 : f32 to vector<16x16xf32>
    %531 = arith.mulf %528, %530 : vector<16x16xf32>
    %532 = arith.addf %507, %531 : vector<16x16xf32>
    %533 = vector.extract_strided_slice %520 {offsets = [2, 0, 0], sizes = [1, 16, 16], strides = [1, 1, 1]} : vector<4x16x16xf32> to vector<1x16x16xf32>
    %534 = vector.shape_cast %533 : vector<1x16x16xf32> to vector<16x16xf32>
    %c34_146 = arith.constant 34 : index
    %535 = memref.load %arg2[%c34_146] : memref<36xf32, #tpu.memory_space<smem>>
    %536 = vector.broadcast %535 : f32 to vector<16x16xf32>
    %537 = arith.mulf %534, %536 : vector<16x16xf32>
    %538 = arith.addf %513, %537 : vector<16x16xf32>
    %539 = vector.extract_strided_slice %520 {offsets = [3, 0, 0], sizes = [1, 16, 16], strides = [1, 1, 1]} : vector<4x16x16xf32> to vector<1x16x16xf32>
    %540 = vector.shape_cast %539 : vector<1x16x16xf32> to vector<16x16xf32>
    %c35_147 = arith.constant 35 : index
    %541 = memref.load %arg2[%c35_147] : memref<36xf32, #tpu.memory_space<smem>>
    %542 = vector.broadcast %541 : f32 to vector<16x16xf32>
    %543 = arith.mulf %540, %542 : vector<16x16xf32>
    %544 = arith.addf %519, %543 : vector<16x16xf32>
    %c0_148 = arith.constant 0 : index
    %545 = memref.load %arg3[%c0_148] : memref<16xf32, #tpu.memory_space<smem>>
    %546 = vector.broadcast %545 : f32 to vector<16x16xf32>
    %547 = arith.mulf %526, %546 : vector<16x16xf32>
    %c1_149 = arith.constant 1 : index
    %548 = memref.load %arg3[%c1_149] : memref<16xf32, #tpu.memory_space<smem>>
    %549 = vector.broadcast %548 : f32 to vector<16x16xf32>
    %550 = arith.mulf %532, %549 : vector<16x16xf32>
    %551 = arith.addf %547, %550 : vector<16x16xf32>
    %c2_150 = arith.constant 2 : index
    %552 = memref.load %arg3[%c2_150] : memref<16xf32, #tpu.memory_space<smem>>
    %553 = vector.broadcast %552 : f32 to vector<16x16xf32>
    %554 = arith.mulf %538, %553 : vector<16x16xf32>
    %555 = arith.addf %551, %554 : vector<16x16xf32>
    %c3_151 = arith.constant 3 : index
    %556 = memref.load %arg3[%c3_151] : memref<16xf32, #tpu.memory_space<smem>>
    %557 = vector.broadcast %556 : f32 to vector<16x16xf32>
    %558 = arith.mulf %544, %557 : vector<16x16xf32>
    %559 = arith.addf %555, %558 : vector<16x16xf32>
    %c0_152 = arith.constant 0 : index
    %560 = memref.load %arg4[%c0_152] : memref<4xf32, #tpu.memory_space<smem>>
    %561 = vector.broadcast %560 : f32 to vector<16x16xf32>
    %562 = arith.addf %559, %561 : vector<16x16xf32>
    %c4_153 = arith.constant 4 : index
    %563 = memref.load %arg3[%c4_153] : memref<16xf32, #tpu.memory_space<smem>>
    %564 = vector.broadcast %563 : f32 to vector<16x16xf32>
    %565 = arith.mulf %526, %564 : vector<16x16xf32>
    %c5_154 = arith.constant 5 : index
    %566 = memref.load %arg3[%c5_154] : memref<16xf32, #tpu.memory_space<smem>>
    %567 = vector.broadcast %566 : f32 to vector<16x16xf32>
    %568 = arith.mulf %532, %567 : vector<16x16xf32>
    %569 = arith.addf %565, %568 : vector<16x16xf32>
    %c6_155 = arith.constant 6 : index
    %570 = memref.load %arg3[%c6_155] : memref<16xf32, #tpu.memory_space<smem>>
    %571 = vector.broadcast %570 : f32 to vector<16x16xf32>
    %572 = arith.mulf %538, %571 : vector<16x16xf32>
    %573 = arith.addf %569, %572 : vector<16x16xf32>
    %c7_156 = arith.constant 7 : index
    %574 = memref.load %arg3[%c7_156] : memref<16xf32, #tpu.memory_space<smem>>
    %575 = vector.broadcast %574 : f32 to vector<16x16xf32>
    %576 = arith.mulf %544, %575 : vector<16x16xf32>
    %577 = arith.addf %573, %576 : vector<16x16xf32>
    %c1_157 = arith.constant 1 : index
    %578 = memref.load %arg4[%c1_157] : memref<4xf32, #tpu.memory_space<smem>>
    %579 = vector.broadcast %578 : f32 to vector<16x16xf32>
    %580 = arith.addf %577, %579 : vector<16x16xf32>
    %c8_158 = arith.constant 8 : index
    %581 = memref.load %arg3[%c8_158] : memref<16xf32, #tpu.memory_space<smem>>
    %582 = vector.broadcast %581 : f32 to vector<16x16xf32>
    %583 = arith.mulf %526, %582 : vector<16x16xf32>
    %c9_159 = arith.constant 9 : index
    %584 = memref.load %arg3[%c9_159] : memref<16xf32, #tpu.memory_space<smem>>
    %585 = vector.broadcast %584 : f32 to vector<16x16xf32>
    %586 = arith.mulf %532, %585 : vector<16x16xf32>
    %587 = arith.addf %583, %586 : vector<16x16xf32>
    %c10_160 = arith.constant 10 : index
    %588 = memref.load %arg3[%c10_160] : memref<16xf32, #tpu.memory_space<smem>>
    %589 = vector.broadcast %588 : f32 to vector<16x16xf32>
    %590 = arith.mulf %538, %589 : vector<16x16xf32>
    %591 = arith.addf %587, %590 : vector<16x16xf32>
    %c11_161 = arith.constant 11 : index
    %592 = memref.load %arg3[%c11_161] : memref<16xf32, #tpu.memory_space<smem>>
    %593 = vector.broadcast %592 : f32 to vector<16x16xf32>
    %594 = arith.mulf %544, %593 : vector<16x16xf32>
    %595 = arith.addf %591, %594 : vector<16x16xf32>
    %c2_162 = arith.constant 2 : index
    %596 = memref.load %arg4[%c2_162] : memref<4xf32, #tpu.memory_space<smem>>
    %597 = vector.broadcast %596 : f32 to vector<16x16xf32>
    %598 = arith.addf %595, %597 : vector<16x16xf32>
    %c12_163 = arith.constant 12 : index
    %599 = memref.load %arg3[%c12_163] : memref<16xf32, #tpu.memory_space<smem>>
    %600 = vector.broadcast %599 : f32 to vector<16x16xf32>
    %601 = arith.mulf %526, %600 : vector<16x16xf32>
    %c13_164 = arith.constant 13 : index
    %602 = memref.load %arg3[%c13_164] : memref<16xf32, #tpu.memory_space<smem>>
    %603 = vector.broadcast %602 : f32 to vector<16x16xf32>
    %604 = arith.mulf %532, %603 : vector<16x16xf32>
    %605 = arith.addf %601, %604 : vector<16x16xf32>
    %c14_165 = arith.constant 14 : index
    %606 = memref.load %arg3[%c14_165] : memref<16xf32, #tpu.memory_space<smem>>
    %607 = vector.broadcast %606 : f32 to vector<16x16xf32>
    %608 = arith.mulf %538, %607 : vector<16x16xf32>
    %609 = arith.addf %605, %608 : vector<16x16xf32>
    %c15_166 = arith.constant 15 : index
    %610 = memref.load %arg3[%c15_166] : memref<16xf32, #tpu.memory_space<smem>>
    %611 = vector.broadcast %610 : f32 to vector<16x16xf32>
    %612 = arith.mulf %544, %611 : vector<16x16xf32>
    %613 = arith.addf %609, %612 : vector<16x16xf32>
    %c3_167 = arith.constant 3 : index
    %614 = memref.load %arg4[%c3_167] : memref<4xf32, #tpu.memory_space<smem>>
    %615 = vector.broadcast %614 : f32 to vector<16x16xf32>
    %616 = arith.addf %613, %615 : vector<16x16xf32>
    %c0_168 = arith.constant 0 : index
    %c0_169 = arith.constant 0 : index
    %c0_170 = arith.constant 0 : index
    %c0_171 = arith.constant 0 : index
    %617 = vector.load %arg1[%c0_168, %c0_169, %c0_170, %c0_171] : memref<1x4x16x16xf32, #tpu.memory_space<vmem>>, vector<1x1x16x16xf32>
    %618 = vector.shape_cast %617 : vector<1x1x16x16xf32> to vector<16x16xf32>
    %619 = arith.addf %618, %562 : vector<16x16xf32>
    %c0_172 = arith.constant 0 : index
    %c0_173 = arith.constant 0 : index
    %c0_174 = arith.constant 0 : index
    %c0_175 = arith.constant 0 : index
    %620 = vector.load %arg5[%c0_172, %c0_173, %c0_174, %c0_175] : memref<1x4x16x16xf32, #tpu.memory_space<vmem>>, vector<1x1x16x16xf32>
    %621 = vector.shape_cast %620 : vector<1x1x16x16xf32> to vector<16x16xf32>
    %622 = vector.shape_cast %619 : vector<16x16xf32> to vector<1x1x16x16xf32>
    tpu.vector_store %arg5[%c0_172, %c0_173, %c0_174, %c0_175], %622 {strides = array<i32>} : memref<1x4x16x16xf32, #tpu.memory_space<vmem>>, vector<1x1x16x16xf32>,
    %c0_176 = arith.constant 0 : index
    %c1_177 = arith.constant 1 : index
    %c0_178 = arith.constant 0 : index
    %c0_179 = arith.constant 0 : index
    %623 = vector.load %arg1[%c0_176, %c1_177, %c0_178, %c0_179] : memref<1x4x16x16xf32, #tpu.memory_space<vmem>>, vector<1x1x16x16xf32>
    %624 = vector.shape_cast %623 : vector<1x1x16x16xf32> to vector<16x16xf32>
    %625 = arith.addf %624, %580 : vector<16x16xf32>
    %c0_180 = arith.constant 0 : index
    %c1_181 = arith.constant 1 : index
    %c0_182 = arith.constant 0 : index
    %c0_183 = arith.constant 0 : index
    %626 = vector.load %arg5[%c0_180, %c1_181, %c0_182, %c0_183] : memref<1x4x16x16xf32, #tpu.memory_space<vmem>>, vector<1x1x16x16xf32>
    %627 = vector.shape_cast %626 : vector<1x1x16x16xf32> to vector<16x16xf32>
    %628 = vector.shape_cast %625 : vector<16x16xf32> to vector<1x1x16x16xf32>
    tpu.vector_store %arg5[%c0_180, %c1_181, %c0_182, %c0_183], %628 {strides = array<i32>} : memref<1x4x16x16xf32, #tpu.memory_space<vmem>>, vector<1x1x16x16xf32>,
    %c0_184 = arith.constant 0 : index
    %c2_185 = arith.constant 2 : index
    %c0_186 = arith.constant 0 : index
    %c0_187 = arith.constant 0 : index
    %629 = vector.load %arg1[%c0_184, %c2_185, %c0_186, %c0_187] : memref<1x4x16x16xf32, #tpu.memory_space<vmem>>, vector<1x1x16x16xf32>
    %630 = vector.shape_cast %629 : vector<1x1x16x16xf32> to vector<16x16xf32>
    %631 = arith.addf %630, %598 : vector<16x16xf32>
    %c0_188 = arith.constant 0 : index
    %c2_189 = arith.constant 2 : index
    %c0_190 = arith.constant 0 : index
    %c0_191 = arith.constant 0 : index
    %632 = vector.load %arg5[%c0_188, %c2_189, %c0_190, %c0_191] : memref<1x4x16x16xf32, #tpu.memory_space<vmem>>, vector<1x1x16x16xf32>
    %633 = vector.shape_cast %632 : vector<1x1x16x16xf32> to vector<16x16xf32>
    %634 = vector.shape_cast %631 : vector<16x16xf32> to vector<1x1x16x16xf32>
    tpu.vector_store %arg5[%c0_188, %c2_189, %c0_190, %c0_191], %634 {strides = array<i32>} : memref<1x4x16x16xf32, #tpu.memory_space<vmem>>, vector<1x1x16x16xf32>,
    %c0_192 = arith.constant 0 : index
    %c3_193 = arith.constant 3 : index
    %c0_194 = arith.constant 0 : index
    %c0_195 = arith.constant 0 : index
    %635 = vector.load %arg1[%c0_192, %c3_193, %c0_194, %c0_195] : memref<1x4x16x16xf32, #tpu.memory_space<vmem>>, vector<1x1x16x16xf32>
    %636 = vector.shape_cast %635 : vector<1x1x16x16xf32> to vector<16x16xf32>
    %637 = arith.addf %636, %616 : vector<16x16xf32>
    %c0_196 = arith.constant 0 : index
    %c3_197 = arith.constant 3 : index
    %c0_198 = arith.constant 0 : index
    %c0_199 = arith.constant 0 : index
    %638 = vector.load %arg5[%c0_196, %c3_197, %c0_198, %c0_199] : memref<1x4x16x16xf32, #tpu.memory_space<vmem>>, vector<1x1x16x16xf32>
    %639 = vector.shape_cast %638 : vector<1x1x16x16xf32> to vector<16x16xf32>
    %640 = vector.shape_cast %637 : vector<16x16xf32> to vector<1x1x16x16xf32>
    tpu.vector_store %arg5[%c0_196, %c3_197, %c0_198, %c0_199], %640 {strides = array<i32>} : memref<1x4x16x16xf32, #tpu.memory_space<vmem>>, vector<1x1x16x16xf32>,
    return
  }
  func.func @transform_0(%arg0: i32) -> (i32, i32, i32, i32) {
    %c0_i32 = arith.constant 0 : i32
    %c0_i32_0 = arith.constant 0 : i32
    %c0_i32_1 = arith.constant 0 : i32
    %c0_i32_2 = arith.constant 0 : i32
    return %arg0, %c0_i32, %c0_i32_0, %c0_i32_1 : i32, i32, i32, i32
  }
  func.func @transform_1(%arg0: i32) -> i32 {
    %c0_i32 = arith.constant 0 : i32
    %c0_i32_0 = arith.constant 0 : i32
    return %c0_i32 : i32
  }
  func.func @transform_2(%arg0: i32) -> i32 {
    %c0_i32 = arith.constant 0 : i32
    %c0_i32_0 = arith.constant 0 : i32
    return %c0_i32 : i32
  }
  func.func @transform_3(%arg0: i32) -> i32 {
    %c0_i32 = arith.constant 0 : i32
    %c0_i32_0 = arith.constant 0 : i32
    return %c0_i32 : i32
  }
  func.func @transform_4(%arg0: i32) -> (i32, i32, i32, i32) {
    %c0_i32 = arith.constant 0 : i32
    %c0_i32_0 = arith.constant 0 : i32
    %c0_i32_1 = arith.constant 0 : i32
    %c0_i32_2 = arith.constant 0 : i32
    return %arg0, %c0_i32, %c0_i32_0, %c0_i32_1 : i32, i32, i32, i32
  }
}

</mosaic_0001>

<llo_original>
// kernel: tpu_custom_call.1
$region0: #{tpu_custom_call.1}
  #allocation0 [shape = 'u32[]', space=smem, size = 0x4, offset = 0x4, fixed_abs, tag = 'smem constant byte address 0x4 - core index']
  #allocation1 [shape = 'u32[144,128]{1,0:T(1,128)}', space=vmem, size = 0x12000, scoped, tag = 'internal scratch']
  #allocation2 [shape = 'f32[4,18,18]{2,1,0:T(8,128)}', space=vmem, size = 0xc000, scoped, tag = 'scratch operand']
  %s0 = inlined_call_operand.hbm [shape: f32[2,4,16,16], index: 0, kind: input, shape index: {}]
  %s1 = inlined_call_operand.vmem [shape: f32[36], index: 1, kind: input, shape index: {}]
  %s2 = inlined_call_operand.vmem [shape: f32[16], index: 2, kind: input, shape index: {}]
  %s3 = inlined_call_operand.vmem [shape: f32[4], index: 3, kind: input, shape index: {}]
  %s4 = inlined_call_operand.hbm [shape: f32[2,4,16,16], index: 4, kind: output, shape index: {}]
  %s5 = sld [smem:[#allocation0]]
  $region65: #{tpu_custom_call.1} parent=0
    _
  %s7 = ssub.s32 1, %s5
  %s8 = scalar_select 0, %s7, %s5
  $region1: #{tpu_custom_call.1} parent=0
    #allocation3 [shape = 'u8[65536]{0}', space=vmem, size = 0x10000, scoped, tag = 'input window, operand 0']
    #allocation4 [shape = 's32[2]{0}', space=sflag, size = 0x8, scoped, tag = 'scoped memory for tpu_custom_call.1']
    #allocation5 [shape = 's32[2]{0}', space=sflag, size = 0x8, scoped, tag = 'scoped memory for tpu_custom_call.1']
    #allocation6 [shape = 's32[2]{0}', space=sflag, size = 0x8, scoped, tag = 'scoped memory for tpu_custom_call.1']
    #allocation7 [shape = 'u8[512]{0}', space=smem, size = 0x200, scoped, tag = 'input window, operand 1, single buffered']
    #allocation8 [shape = 'u8[512]{0}', space=smem, size = 0x200, scoped, tag = 'input window, operand 2, single buffered']
    #allocation9 [shape = 's32[1]{0}', space=sflag, size = 0x4, scoped, tag = 'scoped memory for tpu_custom_call.1']
    #allocation10 [shape = 'u8[512]{0}', space=smem, size = 0x200, scoped, tag = 'input window, operand 3, single buffered']
    #allocation11 [shape = 'u8[65536]{0}', space=vmem, size = 0x10000, scoped, tag = 'output window, operand 0']
    %9 = vsyncpa [#allocation4], 0
    %s10 = scalar_lea.sflag [#allocation4], 1
    %11 = vsyncpa %s10, 0
    %12 = vsyncpa [#allocation6], 0
    %13 = vsyncpa [#allocation9], 0
    %14 = vsyncpa [#allocation5], 0
    %s15 = scalar_lea.sflag [#allocation5], 1
    %16 = vsyncpa %s15, 0
    loop: start=0, step=1, limit=4
    $region2: #{tpu_custom_call.1} parent=1 // loop_pre_header
      _
    $region3: #{tpu_custom_call.1} parent=1 // loop_header
      %s18 = sphi 0, %s22
      %p19 = scmp.ge.s32.totalorder %s18, 4
      %s28 = sphi 0, %s30
      %s31 = sphi 0, %s28
      %s32 = sphi 0, %s31
      %s48 = sphi 0, %s32
      %s52 = sphi 0, %s52
      %s54 = sphi 0, %s52
      %s55 = sphi 0, %s54
      %s69 = sphi 0, %s55
      %s73 = sphi 0, %s73
      %s75 = sphi 0, %s73
      %s76 = sphi 0, %s75
      %s90 = sphi 0, %s76
      %s94 = sphi 0, %s94
      %s96 = sphi 0, %s94
      %s97 = sphi 0, %s96
      %s111 = sphi 0, %s97
      %s117 = sphi 0, %s119
      %s120 = sphi 0, %s117
      %s121 = sphi 0, %s120
      %s137 = sphi 0, %s121
    $region4: #{tpu_custom_call.1} parent=1 // loop_header_branch
      %21 = sbr.rel (%p19) target = $region8
    $region5: #{tpu_custom_call.1} parent=1 // loop_body
      %s23 = ssub.s32 %s18, 1
      %s24 = ssub.s32 %s18, 2
      %s25 = sadd.s32 %s18, 1
      %s26 = ssub.s32 %s18, %s25
      %p27 = scmp.eq.s32.totalorder %s26, 0
      %s29 = sadd.s32 %s28, 1
      %s30 = scalar_select %p27, %s28, %s29
      %p33 = pneg %p27
      %p34 = scmp.eq.s32.totalorder %s18, 1
      %p35 = por %p33, %p34
      %p36 = scmp.ne.s32.totalorder %s28, %s31
      %p37 = scmp.eq.s32.totalorder %s18, 0
      %p38 = por %p36, %p37
      %p39 = scmp.ne.s32.totalorder %s28, %s31
      %p40 = scmp.eq.s32.totalorder %s23, 1
      %p41 = por %p39, %p40
      %p42 = scmp.ne.s32.totalorder %s31, %s32
      %p43 = scmp.eq.s32.totalorder %s23, 0
      %p44 = por %p42, %p43
      %p45 = scmp.ne.s32.totalorder %s31, %s32
      %p46 = scmp.eq.s32.totalorder %s24, 1
      %p47 = por %p45, %p46
      %p49 = scmp.ne.s32.totalorder %s32, %s48
      %p50 = scmp.eq.s32.totalorder %s24, 0
      %p51 = por %p49, %p50
      %s53 = sadd.s32 %s52, 1
      %p56 = scmp.eq.s32.totalorder %s18, 1
      %p57 = scmp.ne.s32.totalorder %s52, %s54
      %p58 = scmp.eq.s32.totalorder %s18, 0
      %p59 = por %p57, %p58
      %p60 = scmp.ne.s32.totalorder %s52, %s54
      %p61 = scmp.eq.s32.totalorder %s23, 1
      %p62 = por %p60, %p61
      %p63 = scmp.ne.s32.totalorder %s54, %s55
      %p64 = scmp.eq.s32.totalorder %s23, 0
      %p65 = por %p63, %p64
      %p66 = scmp.ne.s32.totalorder %s54, %s55
      %p67 = scmp.eq.s32.totalorder %s24, 1
      %p68 = por %p66, %p67
      %p70 = scmp.ne.s32.totalorder %s55, %s69
      %p71 = scmp.eq.s32.totalorder %s24, 0
      %p72 = por %p70, %p71
      %s74 = sadd.s32 %s73, 1
      %p77 = scmp.eq.s32.totalorder %s18, 1
      %p78 = scmp.ne.s32.totalorder %s73, %s75
      %p79 = scmp.eq.s32.totalorder %s18, 0
      %p80 = por %p78, %p79
      %p81 = scmp.ne.s32.totalorder %s73, %s75
      %p82 = scmp.eq.s32.totalorder %s23, 1
      %p83 = por %p81, %p82
      %p84 = scmp.ne.s32.totalorder %s75, %s76
      %p85 = scmp.eq.s32.totalorder %s23, 0
      %p86 = por %p84, %p85
      %p87 = scmp.ne.s32.totalorder %s75, %s76
      %p88 = scmp.eq.s32.totalorder %s24, 1
      %p89 = por %p87, %p88
      %p91 = scmp.ne.s32.totalorder %s76, %s90
      %p92 = scmp.eq.s32.totalorder %s24, 0
      %p93 = por %p91, %p92
      %s95 = sadd.s32 %s94, 1
      %p98 = scmp.eq.s32.totalorder %s18, 1
      %p99 = scmp.ne.s32.totalorder %s94, %s96
      %p100 = scmp.eq.s32.totalorder %s18, 0
      %p101 = por %p99, %p100
      %p102 = scmp.ne.s32.totalorder %s94, %s96
      %p103 = scmp.eq.s32.totalorder %s23, 1
      %p104 = por %p102, %p103
      %p105 = scmp.ne.s32.totalorder %s96, %s97
      %p106 = scmp.eq.s32.totalorder %s23, 0
      %p107 = por %p105, %p106
      %p108 = scmp.ne.s32.totalorder %s96, %s97
      %p109 = scmp.eq.s32.totalorder %s24, 1
      %p110 = por %p108, %p109
      %p112 = scmp.ne.s32.totalorder %s97, %s111
      %p113 = scmp.eq.s32.totalorder %s24, 0
      %p114 = por %p112, %p113
      %s115 = ssub.s32 %s18, %s25
      %p116 = scmp.eq.s32.totalorder %s115, 0
      %s118 = sadd.s32 %s117, 1
      %s119 = scalar_select %p116, %s117, %s118
      %p122 = pneg %p116
      %p123 = scmp.eq.s32.totalorder %s18, 1
      %p124 = por %p122, %p123
      %p125 = scmp.ne.s32.totalorder %s117, %s120
      %p126 = scmp.eq.s32.totalorder %s18, 0
      %p127 = por %p125, %p126
      %p128 = scmp.ne.s32.totalorder %s117, %s120
      %p129 = scmp.eq.s32.totalorder %s23, 1
      %p130 = por %p128, %p129
      %p131 = scmp.ne.s32.totalorder %s120, %s121
      %p132 = scmp.eq.s32.totalorder %s23, 0
      %p133 = por %p131, %p132
      %p134 = scmp.ne.s32.totalorder %s120, %s121
      %p135 = scmp.eq.s32.totalorder %s24, 1
      %p136 = por %p134, %p135
      %p138 = scmp.ne.s32.totalorder %s121, %s137
      %p139 = scmp.eq.s32.totalorder %s24, 0
      %p140 = por %p138, %p139
      %p141 = scmp.le.s32.totalorder 1, %s18
      %p142 = scmp.lt.s32.totalorder %s18, 3
      %p143 = pnand %p141, %p142
      %p144 = pneg %p143
      // Predicated region
      $region9: #{tpu_custom_call.1} parent=5 // pred_check
        _
      $region10: #{tpu_custom_call.1} parent=5 // pred_check_branch
        %146 = sbr.rel (%p143) target = $region12
      $region11: #{tpu_custom_call.1} parent=5 // pred_region
        %s147 = ssub.s32 %s18, 1
        // Predicated region
        $region13: #{tpu_custom_call.1} parent=11 // pred_check
          %p148 = pneg %p65
        $region14: #{tpu_custom_call.1} parent=11 // pred_check_branch
          %150 = sbr.rel (%p148) target = $region16
        $region15: #{tpu_custom_call.1} parent=11 // pred_region
          %s152 = ssub.s32 16, 16
          %153 = vsyncadd [#allocation6], %s152
          %s155 = sshll.u32 %s1, 4
          %s156 = int_to_ptr.vmem [resolvable:$true] %s155
          %158 = dma.vmem_to_smem %s156, 16, [#allocation7], [#allocation6]
        $region16: #{tpu_custom_call.1} parent=11 // pred_fallthru
          _
        // Predicated region
        $region17: #{tpu_custom_call.1} parent=11 // pred_check
          %p159 = pneg %p86
        $region18: #{tpu_custom_call.1} parent=11 // pred_check_branch
          %161 = sbr.rel (%p159) target = $region20
        $region19: #{tpu_custom_call.1} parent=11 // pred_region
          %s163 = ssub.s32 16, 16
          %164 = vsyncadd [#allocation9], %s163
          %s166 = sshll.u32 %s2, 4
          %s167 = int_to_ptr.vmem [resolvable:$true] %s166
          %169 = dma.vmem_to_smem %s167, 16, [#allocation8], [#allocation9]
        $region20: #{tpu_custom_call.1} parent=11 // pred_fallthru
          _
        // Predicated region
        $region21: #{tpu_custom_call.1} parent=11 // pred_check
          %p170 = pneg %p107
        $region22: #{tpu_custom_call.1} parent=11 // pred_check_branch
          %172 = sbr.rel (%p170) target = $region24
        $region23: #{tpu_custom_call.1} parent=11 // pred_region
          %s174 = ssub.s32 16, 16
          %175 = vsyncadd [#allocation9], %s174
          %s177 = sshll.u32 %s3, 4
          %s178 = int_to_ptr.vmem [resolvable:$true] %s177
          %180 = dma.vmem_to_smem %s178, 16, [#allocation10], [#allocation9]
        $region24: #{tpu_custom_call.1} parent=11 // pred_fallthru
          _
      $region12: #{tpu_custom_call.1} parent=5 // pred_fallthru
        _
      %p181 = scmp.lt.s32.totalorder %s18, 2
      // Predicated region
      $region25: #{tpu_custom_call.1} parent=5 // pred_check
        %p182 = pneg %p181
      $region26: #{tpu_custom_call.1} parent=5 // pred_check_branch
        %184 = sbr.rel (%p182) target = $region28
      $region27: #{tpu_custom_call.1} parent=5 // pred_region
        // Predicated region
        $region29: #{tpu_custom_call.1} parent=27 // pred_check
          %p185 = pneg %p38
        $region30: #{tpu_custom_call.1} parent=27 // pred_check_branch
          %187 = sbr.rel (%p185) target = $region32
        $region31: #{tpu_custom_call.1} parent=27 // pred_region
          %s188 = sand.u32 %s28, 1
          %s189 = scalar_lea.sflag [#allocation4], %s188
          %s190 = sand.u32 %s28, 1
          %s191 = smul.addr %s190, 64
          %s192 = scalar_lea.vmem [#allocation3], %s191
          %s194 = ssub.s32 1024, 1024
          %195 = vsyncadd %s189, %s194
          %s196 = smul.addr %s18, 8
          %s197 = smul.addr %s196, 128
          %s198 = scalar_lea.hbm %s0, %s197
          %s199 = sshll.u32 %s192, 4
          %s200 = int_to_ptr.vmem [resolvable:$true] %s199
          %205 = dma.hbm_to_vmem [thread:$0]  %s198, 1024, %s200, %s189, 128, 128, 8
        $region32: #{tpu_custom_call.1} parent=27 // pred_fallthru
          _
      $region28: #{tpu_custom_call.1} parent=5 // pred_fallthru
        _
      %p206 = scmp.le.s32.totalorder 1, %s18
      %p207 = scmp.lt.s32.totalorder %s18, 3
      %p208 = pnand %p206, %p207
      %p209 = pneg %p208
      // Predicated region
      $region33: #{tpu_custom_call.1} parent=5 // pred_check
        _
      $region34: #{tpu_custom_call.1} parent=5 // pred_check_branch
        %211 = sbr.rel (%p208) target = $region36
      $region35: #{tpu_custom_call.1} parent=5 // pred_region
        %s212 = ssub.s32 %s18, 1
        %s213 = sand.u32 %s31, 1
        %s214 = scalar_lea.sflag [#allocation4], %s213
        %s215 = sand.u32 %s31, 1
        %s216 = smul.addr %s215, 64
        %s217 = scalar_lea.vmem [#allocation3], %s216
        // Predicated region
        $region37: #{tpu_custom_call.1} parent=35 // pred_check
          %p218 = pneg %p44
        $region38: #{tpu_custom_call.1} parent=35 // pred_check_branch
          %220 = sbr.rel (%p218) target = $region40
        $region39: #{tpu_custom_call.1} parent=35 // pred_region
          %221 = dma.done %s214, 1024
        $region40: #{tpu_custom_call.1} parent=35 // pred_fallthru
          _
        // Predicated region
        $region41: #{tpu_custom_call.1} parent=35 // pred_check
          %p222 = pneg %p65
        $region42: #{tpu_custom_call.1} parent=35 // pred_check_branch
          %224 = sbr.rel (%p222) target = $region44
        $region43: #{tpu_custom_call.1} parent=35 // pred_region
          %225 = dma.done [#allocation6], 16
        $region44: #{tpu_custom_call.1} parent=35 // pred_fallthru
          _
        // Predicated region
        $region45: #{tpu_custom_call.1} parent=35 // pred_check
          %p226 = pneg %p86
        $region46: #{tpu_custom_call.1} parent=35 // pred_check_branch
          %228 = sbr.rel (%p226) target = $region48
        $region47: #{tpu_custom_call.1} parent=35 // pred_region
          %229 = dma.done [#allocation9], 16
        $region48: #{tpu_custom_call.1} parent=35 // pred_fallthru
          _
        // Predicated region
        $region49: #{tpu_custom_call.1} parent=35 // pred_check
          %p230 = pneg %p107
        $region50: #{tpu_custom_call.1} parent=35 // pred_check_branch
          %232 = sbr.rel (%p230) target = $region52
        $region51: #{tpu_custom_call.1} parent=35 // pred_region
          %233 = dma.done [#allocation9], 16
        $region52: #{tpu_custom_call.1} parent=35 // pred_fallthru
          _
        %234 = sfence
        %s235 = sand.u32 %s31, 1
        %s236 = scalar_lea.sflag [#allocation4], %s235
        %s237 = sand.u32 %s31, 1
        %s238 = smul.addr %s237, 64
        %s239 = scalar_lea.vmem [#allocation3], %s238
        %p240 = pneg %p44
        %p241 = pneg %p41
        %p242 = pneg %p65
        %p243 = pneg %p62
        %p244 = pneg %p86
        %p245 = pneg %p83
        %p246 = pneg %p107
        %p247 = pneg %p104
        %p248 = pneg %p133
        %p249 = pneg %p130
        %s250 = sand.u32 %s120, 1
        %s251 = scalar_lea.sflag [#allocation5], %s250
        %s252 = sand.u32 %s120, 1
        %s253 = smul.addr %s252, 64
        %s254 = scalar_lea.vmem [#allocation11], %s253
        %vm255 = vcmask 139264
        %256 = vst.msk [vmem:[#allocation2] sm:$0x1] %vm255, 0.0
        %257 = vst.msk [vmem:[#allocation2 + $0x18] sm:$0x1] %vm255, 0.0
        %258 = vst.msk [vmem:[#allocation2 + $0x30] sm:$0x1] %vm255, 0.0
        %259 = vst.msk [vmem:[#allocation2 + $0x48] sm:$0x1] %vm255, 0.0
        %260 = vst.msk [vmem:[#allocation2 + $0x11] sm:$0x1] %vm255, 0.0
        %261 = vst.msk [vmem:[#allocation2 + $0x29] sm:$0x1] %vm255, 0.0
        %262 = vst.msk [vmem:[#allocation2 + $0x41] sm:$0x1] %vm255, 0.0
        %263 = vst.msk [vmem:[#allocation2 + $0x59] sm:$0x1] %vm255, 0.0
        %vm264 = vcmask 7168
        %265 = vst.msk [vmem:[#allocation2] sm:$0xff] %vm264, 0.0
        %266 = vst.msk [vmem:[#allocation2 + $0x8] sm:$0xff] %vm264, 0.0
        %vm267 = vcmask 1024
        %268 = vst.msk [vmem:[#allocation2 + $0x10] sm:$0x3] %vm267, 0.0
        %269 = vst.msk [vmem:[#allocation2 + $0x18] sm:$0xff] %vm264, 0.0
        %270 = vst.msk [vmem:[#allocation2 + $0x20] sm:$0xff] %vm264, 0.0
        %271 = vst.msk [vmem:[#allocation2 + $0x28] sm:$0x3] %vm267, 0.0
        %272 = vst.msk [vmem:[#allocation2 + $0x30] sm:$0xff] %vm264, 0.0
        %273 = vst.msk [vmem:[#allocation2 + $0x38] sm:$0xff] %vm264, 0.0
        %274 = vst.msk [vmem:[#allocation2 + $0x40] sm:$0x3] %vm267, 0.0
        %275 = vst.msk [vmem:[#allocation2 + $0x48] sm:$0xff] %vm264, 0.0
        %276 = vst.msk [vmem:[#allocation2 + $0x50] sm:$0xff] %vm264, 0.0
        %277 = vst.msk [vmem:[#allocation2 + $0x58] sm:$0x3] %vm267, 0.0
        %vm278 = vcmask 146568
        %279 = vst.msk [vmem:[#allocation2] sm:$0xff] %vm278, 0.0
        %280 = vst.msk [vmem:[#allocation2 + $0x8] sm:$0xff] %vm278, 0.0
        %vm281 = vcmask 140424
        %282 = vst.msk [vmem:[#allocation2 + $0x10] sm:$0x3] %vm281, 0.0
        %283 = vst.msk [vmem:[#allocation2 + $0x18] sm:$0xff] %vm278, 0.0
        %284 = vst.msk [vmem:[#allocation2 + $0x20] sm:$0xff] %vm278, 0.0
        %285 = vst.msk [vmem:[#allocation2 + $0x28] sm:$0x3] %vm281, 0.0
        %286 = vst.msk [vmem:[#allocation2 + $0x30] sm:$0xff] %vm278, 0.0
        %287 = vst.msk [vmem:[#allocation2 + $0x38] sm:$0xff] %vm278, 0.0
        %288 = vst.msk [vmem:[#allocation2 + $0x40] sm:$0x3] %vm281, 0.0
        %289 = vst.msk [vmem:[#allocation2 + $0x48] sm:$0xff] %vm278, 0.0
        %290 = vst.msk [vmem:[#allocation2 + $0x50] sm:$0xff] %vm278, 0.0
        %291 = vst.msk [vmem:[#allocation2 + $0x58] sm:$0x3] %vm281, 0.0
        %v292 = vld [vmem:[%s217] sm:$0xff]
        %v293 = vld [vmem:[%s217 + $0x8] sm:$0xff]
        %v294 = vld [vmem:[%s217 + $0x10] sm:$0xff]
        %v295 = vld [vmem:[%s217 + $0x18] sm:$0xff]
        %v296 = vld [vmem:[%s217 + $0x20] sm:$0xff]
        %v297 = vld [vmem:[%s217 + $0x28] sm:$0xff]
        %v298 = vld [vmem:[%s217 + $0x30] sm:$0xff]
        %v299 = vld [vmem:[%s217 + $0x38] sm:$0xff]
        %308 = vrot.lane.b32.xlu0 %v292, 1
        %v309 = vpop.permute.xlu0 %308
        %310 = vrot.lane.b32.xlu0 %v293, 1
        %v311 = vpop.permute.xlu0 %310
        %312 = vrot.lane.b32.xlu0 %v294, 1
        %v313 = vpop.permute.xlu0 %312
        %314 = vrot.lane.b32.xlu0 %v295, 1
        %v315 = vpop.permute.xlu0 %314
        %316 = vrot.lane.b32.xlu0 %v296, 1
        %v317 = vpop.permute.xlu0 %316
        %318 = vrot.lane.b32.xlu0 %v297, 1
        %v319 = vpop.permute.xlu0 %318
        %320 = vrot.lane.b32.xlu0 %v298, 1
        %v321 = vpop.permute.xlu0 %320
        %322 = vrot.lane.b32.xlu0 %v299, 1
        %v323 = vpop.permute.xlu0 %322
        %vm332 = vcmask 138248
        %333 = vst.msk [vmem:[#allocation2 + $0x1] sm:$0xff] %vm332, %v309
        %334 = vst.msk [vmem:[#allocation2 + $0x9] sm:$0xff] %vm332, %v311
        %335 = vst.msk [vmem:[#allocation2 + $0x19] sm:$0xff] %vm332, %v313
        %336 = vst.msk [vmem:[#allocation2 + $0x21] sm:$0xff] %vm332, %v315
        %337 = vst.msk [vmem:[#allocation2 + $0x31] sm:$0xff] %vm332, %v317
        %338 = vst.msk [vmem:[#allocation2 + $0x39] sm:$0xff] %vm332, %v319
        %339 = vst.msk [vmem:[#allocation2 + $0x49] sm:$0xff] %vm332, %v321
        %340 = vst.msk [vmem:[#allocation2 + $0x51] sm:$0xff] %vm332, %v323
        %v341 = vld [vmem:[#allocation2] sm:$0xff]
        %v342 = vld [vmem:[#allocation2 + $0x8] sm:$0xff]
        %v343 = vld [vmem:[#allocation2 + $0x18] sm:$0xff]
        %v344 = vld [vmem:[#allocation2 + $0x20] sm:$0xff]
        %v345 = vld [vmem:[#allocation2 + $0x30] sm:$0xff]
        %v346 = vld [vmem:[#allocation2 + $0x38] sm:$0xff]
        %v347 = vld [vmem:[#allocation2 + $0x48] sm:$0xff]
        %v348 = vld [vmem:[#allocation2 + $0x50] sm:$0xff]
        %s349 = sld [smem:[#allocation7]]
        %v350 = vstv %s349
        %v351 = vmul.f32 %v341, %v350
        %v352 = vmul.f32 %v342, %v350
        %s353 = sld [smem:[#allocation7 + $0x1]]
        %v354 = vstv %s353
        %v355 = vmul.f32 %v343, %v354
        %v356 = vmul.f32 %v344, %v354
        %s357 = sld [smem:[#allocation7 + $0x2]]
        %v358 = vstv %s357
        %v359 = vmul.f32 %v345, %v358
        %v360 = vmul.f32 %v346, %v358
        %s361 = sld [smem:[#allocation7 + $0x3]]
        %v362 = vstv %s361
        %v363 = vmul.f32 %v347, %v362
        %v364 = vmul.f32 %v348, %v362
        %s365 = sld [smem:[#allocation7 + $0x4]]
        %v366 = vstv %s365
        %v367 = vmul.f32 %v341, %v366
        %v368 = vmul.f32 %v342, %v366
        %371 = vrot.lane.b32.xlu0 %v367, 127
        %v372 = vpop.permute.xlu0 %371
        %373 = vrot.lane.b32.xlu0 %v368, 127
        %v374 = vpop.permute.xlu0 %373
        %v377 = vadd.f32 %v351, %v372
        %v378 = vadd.f32 %v352, %v374
        %s379 = sld [smem:[#allocation7 + $0x5]]
        %v380 = vstv %s379
        %v381 = vmul.f32 %v343, %v380
        %v382 = vmul.f32 %v344, %v380
        %385 = vrot.lane.b32.xlu0 %v381, 127
        %v386 = vpop.permute.xlu0 %385
        %387 = vrot.lane.b32.xlu0 %v382, 127
        %v388 = vpop.permute.xlu0 %387
        %v391 = vadd.f32 %v355, %v386
        %v392 = vadd.f32 %v356, %v388
        %s393 = sld [smem:[#allocation7 + $0x6]]
        %v394 = vstv %s393
        %v395 = vmul.f32 %v345, %v394
        %v396 = vmul.f32 %v346, %v394
        %399 = vrot.lane.b32.xlu0 %v395, 127
        %v400 = vpop.permute.xlu0 %399
        %401 = vrot.lane.b32.xlu0 %v396, 127
        %v402 = vpop.permute.xlu0 %401
        %v405 = vadd.f32 %v359, %v400
        %v406 = vadd.f32 %v360, %v402
        %s407 = sld [smem:[#allocation7 + $0x7]]
        %v408 = vstv %s407
        %v409 = vmul.f32 %v347, %v408
        %v410 = vmul.f32 %v348, %v408
        %413 = vrot.lane.b32.xlu0 %v409, 127
        %v414 = vpop.permute.xlu0 %413
        %415 = vrot.lane.b32.xlu0 %v410, 127
        %v416 = vpop.permute.xlu0 %415
        %v419 = vadd.f32 %v363, %v414
        %v420 = vadd.f32 %v364, %v416
        %s421 = sld [smem:[#allocation7 + $0x8]]
        %v422 = vstv %s421
        %v423 = vmul.f32 %v341, %v422
        %v424 = vmul.f32 %v342, %v422
        %427 = vrot.lane.b32.xlu0 %v423, 126
        %v428 = vpop.permute.xlu0 %427
        %429 = vrot.lane.b32.xlu0 %v424, 126
        %v430 = vpop.permute.xlu0 %429
        %v433 = vadd.f32 %v377, %v428
        %v434 = vadd.f32 %v378, %v430
        %s435 = sld [smem:[#allocation7 + $0x9]]
        %v436 = vstv %s435
        %v437 = vmul.f32 %v343, %v436
        %v438 = vmul.f32 %v344, %v436
        %441 = vrot.lane.b32.xlu0 %v437, 126
        %v442 = vpop.permute.xlu0 %441
        %443 = vrot.lane.b32.xlu0 %v438, 126
        %v444 = vpop.permute.xlu0 %443
        %v447 = vadd.f32 %v391, %v442
        %v448 = vadd.f32 %v392, %v444
        %s449 = sld [smem:[#allocation7 + $0xa]]
        %v450 = vstv %s449
        %v451 = vmul.f32 %v345, %v450
        %v452 = vmul.f32 %v346, %v450
        %455 = vrot.lane.b32.xlu0 %v451, 126
        %v456 = vpop.permute.xlu0 %455
        %457 = vrot.lane.b32.xlu0 %v452, 126
        %v458 = vpop.permute.xlu0 %457
        %v461 = vadd.f32 %v405, %v456
        %v462 = vadd.f32 %v406, %v458
        %s463 = sld [smem:[#allocation7 + $0xb]]
        %v464 = vstv %s463
        %v465 = vmul.f32 %v347, %v464
        %v466 = vmul.f32 %v348, %v464
        %469 = vrot.lane.b32.xlu0 %v465, 126
        %v470 = vpop.permute.xlu0 %469
        %471 = vrot.lane.b32.xlu0 %v466, 126
        %v472 = vpop.permute.xlu0 %471
        %v475 = vadd.f32 %v419, %v470
        %v476 = vadd.f32 %v420, %v472
        %v477 = vld [vmem:[#allocation2 + $0x1] sm:$0xff]
        %v478 = vld [vmem:[#allocation2 + $0x9] sm:$0xff]
        %v479 = vld [vmem:[#allocation2 + $0x19] sm:$0xff]
        %v480 = vld [vmem:[#allocation2 + $0x21] sm:$0xff]
        %v481 = vld [vmem:[#allocation2 + $0x31] sm:$0xff]
        %v482 = vld [vmem:[#allocation2 + $0x39] sm:$0xff]
        %v483 = vld [vmem:[#allocation2 + $0x49] sm:$0xff]
        %v484 = vld [vmem:[#allocation2 + $0x51] sm:$0xff]
        %s485 = sld [smem:[#allocation7 + $0xc]]
        %v486 = vstv %s485
        %v487 = vmul.f32 %v477, %v486
        %v488 = vmul.f32 %v478, %v486
        %v489 = vadd.f32 %v433, %v487
        %v490 = vadd.f32 %v434, %v488
        %s491 = sld [smem:[#allocation7 + $0xd]]
        %v492 = vstv %s491
        %v493 = vmul.f32 %v479, %v492
        %v494 = vmul.f32 %v480, %v492
        %v495 = vadd.f32 %v447, %v493
        %v496 = vadd.f32 %v448, %v494
        %s497 = sld [smem:[#allocation7 + $0xe]]
        %v498 = vstv %s497
        %v499 = vmul.f32 %v481, %v498
        %v500 = vmul.f32 %v482, %v498
        %v501 = vadd.f32 %v461, %v499
        %v502 = vadd.f32 %v462, %v500
        %s503 = sld [smem:[#allocation7 + $0xf]]
        %v504 = vstv %s503
        %v505 = vmul.f32 %v483, %v504
        %v506 = vmul.f32 %v484, %v504
        %v507 = vadd.f32 %v475, %v505
        %v508 = vadd.f32 %v476, %v506
        %s509 = sld [smem:[#allocation7 + $0x10]]
        %v510 = vstv %s509
        %v511 = vmul.f32 %v477, %v510
        %v512 = vmul.f32 %v478, %v510
        %515 = vrot.lane.b32.xlu0 %v511, 127
        %v516 = vpop.permute.xlu0 %515
        %517 = vrot.lane.b32.xlu0 %v512, 127
        %v518 = vpop.permute.xlu0 %517
        %v521 = vadd.f32 %v489, %v516
        %v522 = vadd.f32 %v490, %v518
        %s523 = sld [smem:[#allocation7 + $0x11]]
        %v524 = vstv %s523
        %v525 = vmul.f32 %v479, %v524
        %v526 = vmul.f32 %v480, %v524
        %529 = vrot.lane.b32.xlu0 %v525, 127
        %v530 = vpop.permute.xlu0 %529
        %531 = vrot.lane.b32.xlu0 %v526, 127
        %v532 = vpop.permute.xlu0 %531
        %v535 = vadd.f32 %v495, %v530
        %v536 = vadd.f32 %v496, %v532
        %s537 = sld [smem:[#allocation7 + $0x12]]
        %v538 = vstv %s537
        %v539 = vmul.f32 %v481, %v538
        %v540 = vmul.f32 %v482, %v538
        %543 = vrot.lane.b32.xlu0 %v539, 127
        %v544 = vpop.permute.xlu0 %543
        %545 = vrot.lane.b32.xlu0 %v540, 127
        %v546 = vpop.permute.xlu0 %545
        %v549 = vadd.f32 %v501, %v544
        %v550 = vadd.f32 %v502, %v546
        %s551 = sld [smem:[#allocation7 + $0x13]]
        %v552 = vstv %s551
        %v553 = vmul.f32 %v483, %v552
        %v554 = vmul.f32 %v484, %v552
        %557 = vrot.lane.b32.xlu0 %v553, 127
        %v558 = vpop.permute.xlu0 %557
        %559 = vrot.lane.b32.xlu0 %v554, 127
        %v560 = vpop.permute.xlu0 %559
        %v563 = vadd.f32 %v507, %v558
        %v564 = vadd.f32 %v508, %v560
        %s565 = sld [smem:[#allocation7 + $0x14]]
        %v566 = vstv %s565
        %v567 = vmul.f32 %v477, %v566
        %v568 = vmul.f32 %v478, %v566
        %571 = vrot.lane.b32.xlu0 %v567, 126
        %v572 = vpop.permute.xlu0 %571
        %573 = vrot.lane.b32.xlu0 %v568, 126
        %v574 = vpop.permute.xlu0 %573
        %v577 = vadd.f32 %v521, %v572
        %v578 = vadd.f32 %v522, %v574
        %s579 = sld [smem:[#allocation7 + $0x15]]
        %v580 = vstv %s579
        %v581 = vmul.f32 %v479, %v580
        %v582 = vmul.f32 %v480, %v580
        %585 = vrot.lane.b32.xlu0 %v581, 126
        %v586 = vpop.permute.xlu0 %585
        %587 = vrot.lane.b32.xlu0 %v582, 126
        %v588 = vpop.permute.xlu0 %587
        %v591 = vadd.f32 %v535, %v586
        %v592 = vadd.f32 %v536, %v588
        %s593 = sld [smem:[#allocation7 + $0x16]]
        %v594 = vstv %s593
        %v595 = vmul.f32 %v481, %v594
        %v596 = vmul.f32 %v482, %v594
        %599 = vrot.lane.b32.xlu0 %v595, 126
        %v600 = vpop.permute.xlu0 %599
        %601 = vrot.lane.b32.xlu0 %v596, 126
        %v602 = vpop.permute.xlu0 %601
        %v605 = vadd.f32 %v549, %v600
        %v606 = vadd.f32 %v550, %v602
        %s607 = sld [smem:[#allocation7 + $0x17]]
        %v608 = vstv %s607
        %v609 = vmul.f32 %v483, %v608
        %v610 = vmul.f32 %v484, %v608
        %613 = vrot.lane.b32.xlu0 %v609, 126
        %v614 = vpop.permute.xlu0 %613
        %615 = vrot.lane.b32.xlu0 %v610, 126
        %v616 = vpop.permute.xlu0 %615
        %v619 = vadd.f32 %v563, %v614
        %v620 = vadd.f32 %v564, %v616
        %v621 = vld [vmem:[#allocation2 + $0x2] sm:$0xff]
        %v622 = vld [vmem:[#allocation2 + $0xa] sm:$0xff]
        %v623 = vld [vmem:[#allocation2 + $0x1a] sm:$0xff]
        %v624 = vld [vmem:[#allocation2 + $0x22] sm:$0xff]
        %v625 = vld [vmem:[#allocation2 + $0x32] sm:$0xff]
        %v626 = vld [vmem:[#allocation2 + $0x3a] sm:$0xff]
        %v627 = vld [vmem:[#allocation2 + $0x4a] sm:$0xff]
        %v628 = vld [vmem:[#allocation2 + $0x52] sm:$0xff]
        %s629 = sld [smem:[#allocation7 + $0x18]]
        %v630 = vstv %s629
        %v631 = vmul.f32 %v621, %v630
        %v632 = vmul.f32 %v622, %v630
        %v633 = vadd.f32 %v577, %v631
        %v634 = vadd.f32 %v578, %v632
        %s635 = sld [smem:[#allocation7 + $0x19]]
        %v636 = vstv %s635
        %v637 = vmul.f32 %v623, %v636
        %v638 = vmul.f32 %v624, %v636
        %v639 = vadd.f32 %v591, %v637
        %v640 = vadd.f32 %v592, %v638
        %s641 = sld [smem:[#allocation7 + $0x1a]]
        %v642 = vstv %s641
        %v643 = vmul.f32 %v625, %v642
        %v644 = vmul.f32 %v626, %v642
        %v645 = vadd.f32 %v605, %v643
        %v646 = vadd.f32 %v606, %v644
        %s647 = sld [smem:[#allocation7 + $0x1b]]
        %v648 = vstv %s647
        %v649 = vmul.f32 %v627, %v648
        %v650 = vmul.f32 %v628, %v648
        %v651 = vadd.f32 %v619, %v649
        %v652 = vadd.f32 %v620, %v650
        %s653 = sld [smem:[#allocation7 + $0x1c]]
        %v654 = vstv %s653
        %v655 = vmul.f32 %v621, %v654
        %v656 = vmul.f32 %v622, %v654
        %659 = vrot.lane.b32.xlu0 %v655, 127
        %v660 = vpop.permute.xlu0 %659
        %661 = vrot.lane.b32.xlu0 %v656, 127
        %v662 = vpop.permute.xlu0 %661
        %v665 = vadd.f32 %v633, %v660
        %v666 = vadd.f32 %v634, %v662
        %s667 = sld [smem:[#allocation7 + $0x1d]]
        %v668 = vstv %s667
        %v669 = vmul.f32 %v623, %v668
        %v670 = vmul.f32 %v624, %v668
        %673 = vrot.lane.b32.xlu0 %v669, 127
        %v674 = vpop.permute.xlu0 %673
        %675 = vrot.lane.b32.xlu0 %v670, 127
        %v676 = vpop.permute.xlu0 %675
        %v679 = vadd.f32 %v639, %v674
        %v680 = vadd.f32 %v640, %v676
        %s681 = sld [smem:[#allocation7 + $0x1e]]
        %v682 = vstv %s681
        %v683 = vmul.f32 %v625, %v682
        %v684 = vmul.f32 %v626, %v682
        %687 = vrot.lane.b32.xlu0 %v683, 127
        %v688 = vpop.permute.xlu0 %687
        %689 = vrot.lane.b32.xlu0 %v684, 127
        %v690 = vpop.permute.xlu0 %689
        %v693 = vadd.f32 %v645, %v688
        %v694 = vadd.f32 %v646, %v690
        %s695 = sld [smem:[#allocation7 + $0x1f]]
        %v696 = vstv %s695
        %v697 = vmul.f32 %v627, %v696
        %v698 = vmul.f32 %v628, %v696
        %701 = vrot.lane.b32.xlu0 %v697, 127
        %v702 = vpop.permute.xlu0 %701
        %703 = vrot.lane.b32.xlu0 %v698, 127
        %v704 = vpop.permute.xlu0 %703
        %v707 = vadd.f32 %v651, %v702
        %v708 = vadd.f32 %v652, %v704
        %s709 = sld [smem:[#allocation7 + $0x20]]
        %v710 = vstv %s709
        %v711 = vmul.f32 %v621, %v710
        %v712 = vmul.f32 %v622, %v710
        %715 = vrot.lane.b32.xlu0 %v711, 126
        %v716 = vpop.permute.xlu0 %715
        %717 = vrot.lane.b32.xlu0 %v712, 126
        %v718 = vpop.permute.xlu0 %717
        %v721 = vadd.f32 %v665, %v716
        %v722 = vadd.f32 %v666, %v718
        %s723 = sld [smem:[#allocation7 + $0x21]]
        %v724 = vstv %s723
        %v725 = vmul.f32 %v623, %v724
        %v726 = vmul.f32 %v624, %v724
        %729 = vrot.lane.b32.xlu0 %v725, 126
        %v730 = vpop.permute.xlu0 %729
        %731 = vrot.lane.b32.xlu0 %v726, 126
        %v732 = vpop.permute.xlu0 %731
        %v735 = vadd.f32 %v679, %v730
        %v736 = vadd.f32 %v680, %v732
        %s737 = sld [smem:[#allocation7 + $0x22]]
        %v738 = vstv %s737
        %v739 = vmul.f32 %v625, %v738
        %v740 = vmul.f32 %v626, %v738
        %743 = vrot.lane.b32.xlu0 %v739, 126
        %v744 = vpop.permute.xlu0 %743
        %745 = vrot.lane.b32.xlu0 %v740, 126
        %v746 = vpop.permute.xlu0 %745
        %v749 = vadd.f32 %v693, %v744
        %v750 = vadd.f32 %v694, %v746
        %s751 = sld [smem:[#allocation7 + $0x23]]
        %v752 = vstv %s751
        %v753 = vmul.f32 %v627, %v752
        %v754 = vmul.f32 %v628, %v752
        %757 = vrot.lane.b32.xlu0 %v753, 126
        %v758 = vpop.permute.xlu0 %757
        %759 = vrot.lane.b32.xlu0 %v754, 126
        %v760 = vpop.permute.xlu0 %759
        %v763 = vadd.f32 %v707, %v758
        %v764 = vadd.f32 %v708, %v760
        %s765 = sld [smem:[#allocation8]]
        %v766 = vstv %s765
        %v767 = vmul.f32 %v721, %v766
        %v768 = vmul.f32 %v722, %v766
        %s769 = sld [smem:[#allocation8 + $0x1]]
        %v770 = vstv %s769
        %v771 = vmul.f32 %v735, %v770
        %v772 = vmul.f32 %v736, %v770
        %v773 = vadd.f32 %v767, %v771
        %v774 = vadd.f32 %v768, %v772
        %s775 = sld [smem:[#allocation8 + $0x2]]
        %v776 = vstv %s775
        %v777 = vmul.f32 %v749, %v776
        %v778 = vmul.f32 %v750, %v776
        %v779 = vadd.f32 %v773, %v777
        %v780 = vadd.f32 %v774, %v778
        %s781 = sld [smem:[#allocation8 + $0x3]]
        %v782 = vstv %s781
        %v783 = vmul.f32 %v763, %v782
        %v784 = vmul.f32 %v764, %v782
        %v785 = vadd.f32 %v779, %v783
        %v786 = vadd.f32 %v780, %v784
        %s787 = sld [smem:[#allocation10]]
        %v788 = vstv %s787
        %v789 = vadd.f32 %v785, %v788
        %v790 = vadd.f32 %v786, %v788
        %s791 = sld [smem:[#allocation8 + $0x4]]
        %v792 = vstv %s791
        %v793 = vmul.f32 %v721, %v792
        %v794 = vmul.f32 %v722, %v792
        %s795 = sld [smem:[#allocation8 + $0x5]]
        %v796 = vstv %s795
        %v797 = vmul.f32 %v735, %v796
        %v798 = vmul.f32 %v736, %v796
        %v799 = vadd.f32 %v793, %v797
        %v800 = vadd.f32 %v794, %v798
        %s801 = sld [smem:[#allocation8 + $0x6]]
        %v802 = vstv %s801
        %v803 = vmul.f32 %v749, %v802
        %v804 = vmul.f32 %v750, %v802
        %v805 = vadd.f32 %v799, %v803
        %v806 = vadd.f32 %v800, %v804
        %s807 = sld [smem:[#allocation8 + $0x7]]
        %v808 = vstv %s807
        %v809 = vmul.f32 %v763, %v808
        %v810 = vmul.f32 %v764, %v808
        %v811 = vadd.f32 %v805, %v809
        %v812 = vadd.f32 %v806, %v810
        %s813 = sld [smem:[#allocation10 + $0x1]]
        %v814 = vstv %s813
        %v815 = vadd.f32 %v811, %v814
        %v816 = vadd.f32 %v812, %v814
        %s817 = sld [smem:[#allocation8 + $0x8]]
        %v818 = vstv %s817
        %v819 = vmul.f32 %v721, %v818
        %v820 = vmul.f32 %v722, %v818
        %s821 = sld [smem:[#allocation8 + $0x9]]
        %v822 = vstv %s821
        %v823 = vmul.f32 %v735, %v822
        %v824 = vmul.f32 %v736, %v822
        %v825 = vadd.f32 %v819, %v823
        %v826 = vadd.f32 %v820, %v824
        %s827 = sld [smem:[#allocation8 + $0xa]]
        %v828 = vstv %s827
        %v829 = vmul.f32 %v749, %v828
        %v830 = vmul.f32 %v750, %v828
        %v831 = vadd.f32 %v825, %v829
        %v832 = vadd.f32 %v826, %v830
        %s833 = sld [smem:[#allocation8 + $0xb]]
        %v834 = vstv %s833
        %v835 = vmul.f32 %v763, %v834
        %v836 = vmul.f32 %v764, %v834
        %v837 = vadd.f32 %v831, %v835
        %v838 = vadd.f32 %v832, %v836
        %s839 = sld [smem:[#allocation10 + $0x2]]
        %v840 = vstv %s839
        %v841 = vadd.f32 %v837, %v840
        %v842 = vadd.f32 %v838, %v840
        %s843 = sld [smem:[#allocation8 + $0xc]]
        %v844 = vstv %s843
        %v845 = vmul.f32 %v721, %v844
        %v846 = vmul.f32 %v722, %v844
        %s847 = sld [smem:[#allocation8 + $0xd]]
        %v848 = vstv %s847
        %v849 = vmul.f32 %v735, %v848
        %v850 = vmul.f32 %v736, %v848
        %v851 = vadd.f32 %v845, %v849
        %v852 = vadd.f32 %v846, %v850
        %s853 = sld [smem:[#allocation8 + $0xe]]
        %v854 = vstv %s853
        %v855 = vmul.f32 %v749, %v854
        %v856 = vmul.f32 %v750, %v854
        %v857 = vadd.f32 %v851, %v855
        %v858 = vadd.f32 %v852, %v856
        %s859 = sld [smem:[#allocation8 + $0xf]]
        %v860 = vstv %s859
        %v861 = vmul.f32 %v763, %v860
        %v862 = vmul.f32 %v764, %v860
        %v863 = vadd.f32 %v857, %v861
        %v864 = vadd.f32 %v858, %v862
        %s865 = sld [smem:[#allocation10 + $0x3]]
        %v866 = vstv %s865
        %v867 = vadd.f32 %v863, %v866
        %v868 = vadd.f32 %v864, %v866
        %v869 = vmax.f32 %v789, 0.0
        %v870 = vmax.f32 %v790, 0.0
        %873 = vrot.lane.b32.xlu0 %v869, 1
        %v874 = vpop.permute.xlu0 %873
        %875 = vrot.lane.b32.xlu0 %v870, 1
        %v876 = vpop.permute.xlu0 %875
        %879 = vst.msk [vmem:[#allocation2 + $0x1] sm:$0xff] %vm332, %v874
        %880 = vst.msk [vmem:[#allocation2 + $0x9] sm:$0xff] %vm332, %v876
        %v881 = vmax.f32 %v815, 0.0
        %v882 = vmax.f32 %v816, 0.0
        %885 = vrot.lane.b32.xlu0 %v881, 1
        %v886 = vpop.permute.xlu0 %885
        %887 = vrot.lane.b32.xlu0 %v882, 1
        %v888 = vpop.permute.xlu0 %887
        %s891 = scalar_lea.vmem [#allocation2], 24
        %892 = vst.msk [vmem:[%s891 + $0x1] sm:$0xff] %vm332, %v886
        %893 = vst.msk [vmem:[%s891 + $0x9] sm:$0xff] %vm332, %v888
        %v894 = vmax.f32 %v841, 0.0
        %v895 = vmax.f32 %v842, 0.0
        %898 = vrot.lane.b32.xlu0 %v894, 1
        %v899 = vpop.permute.xlu0 %898
        %900 = vrot.lane.b32.xlu0 %v895, 1
        %v901 = vpop.permute.xlu0 %900
        %s904 = scalar_lea.vmem [#allocation2], 48
        %905 = vst.msk [vmem:[%s904 + $0x1] sm:$0xff] %vm332, %v899
        %906 = vst.msk [vmem:[%s904 + $0x9] sm:$0xff] %vm332, %v901
        %v907 = vmax.f32 %v867, 0.0
        %v908 = vmax.f32 %v868, 0.0
        %911 = vrot.lane.b32.xlu0 %v907, 1
        %v912 = vpop.permute.xlu0 %911
        %913 = vrot.lane.b32.xlu0 %v908, 1
        %v914 = vpop.permute.xlu0 %913
        %s917 = scalar_lea.vmem [#allocation2], 72
        %918 = vst.msk [vmem:[%s917 + $0x1] sm:$0xff] %vm332, %v912
        %919 = vst.msk [vmem:[%s917 + $0x9] sm:$0xff] %vm332, %v914
        %v920 = vld [vmem:[#allocation2] sm:$0xff]
        %v921 = vld [vmem:[#allocation2 + $0x8] sm:$0xff]
        %v922 = vld [vmem:[#allocation2 + $0x18] sm:$0xff]
        %v923 = vld [vmem:[#allocation2 + $0x20] sm:$0xff]
        %v924 = vld [vmem:[#allocation2 + $0x30] sm:$0xff]
        %v925 = vld [vmem:[#allocation2 + $0x38] sm:$0xff]
        %v926 = vld [vmem:[#allocation2 + $0x48] sm:$0xff]
        %v927 = vld [vmem:[#allocation2 + $0x50] sm:$0xff]
        %s928 = sld [smem:[#allocation7]]
        %v929 = vstv %s928
        %v930 = vmul.f32 %v920, %v929
        %v931 = vmul.f32 %v921, %v929
        %s932 = sld [smem:[#allocation7 + $0x1]]
        %v933 = vstv %s932
        %v934 = vmul.f32 %v922, %v933
        %v935 = vmul.f32 %v923, %v933
        %s936 = sld [smem:[#allocation7 + $0x2]]
        %v937 = vstv %s936
        %v938 = vmul.f32 %v924, %v937
        %v939 = vmul.f32 %v925, %v937
        %s940 = sld [smem:[#allocation7 + $0x3]]
        %v941 = vstv %s940
        %v942 = vmul.f32 %v926, %v941
        %v943 = vmul.f32 %v927, %v941
        %s944 = sld [smem:[#allocation7 + $0x4]]
        %v945 = vstv %s944
        %v946 = vmul.f32 %v920, %v945
        %v947 = vmul.f32 %v921, %v945
        %950 = vrot.lane.b32.xlu0 %v946, 127
        %v951 = vpop.permute.xlu0 %950
        %952 = vrot.lane.b32.xlu0 %v947, 127
        %v953 = vpop.permute.xlu0 %952
        %v956 = vadd.f32 %v930, %v951
        %v957 = vadd.f32 %v931, %v953
        %s958 = sld [smem:[#allocation7 + $0x5]]
        %v959 = vstv %s958
        %v960 = vmul.f32 %v922, %v959
        %v961 = vmul.f32 %v923, %v959
        %964 = vrot.lane.b32.xlu0 %v960, 127
        %v965 = vpop.permute.xlu0 %964
        %966 = vrot.lane.b32.xlu0 %v961, 127
        %v967 = vpop.permute.xlu0 %966
        %v970 = vadd.f32 %v934, %v965
        %v971 = vadd.f32 %v935, %v967
        %s972 = sld [smem:[#allocation7 + $0x6]]
        %v973 = vstv %s972
        %v974 = vmul.f32 %v924, %v973
        %v975 = vmul.f32 %v925, %v973
        %978 = vrot.lane.b32.xlu0 %v974, 127
        %v979 = vpop.permute.xlu0 %978
        %980 = vrot.lane.b32.xlu0 %v975, 127
        %v981 = vpop.permute.xlu0 %980
        %v984 = vadd.f32 %v938, %v979
        %v985 = vadd.f32 %v939, %v981
        %s986 = sld [smem:[#allocation7 + $0x7]]
        %v987 = vstv %s986
        %v988 = vmul.f32 %v926, %v987
        %v989 = vmul.f32 %v927, %v987
        %992 = vrot.lane.b32.xlu0 %v988, 127
        %v993 = vpop.permute.xlu0 %992
        %994 = vrot.lane.b32.xlu0 %v989, 127
        %v995 = vpop.permute.xlu0 %994
        %v998 = vadd.f32 %v942, %v993
        %v999 = vadd.f32 %v943, %v995
        %s1000 = sld [smem:[#allocation7 + $0x8]]
        %v1001 = vstv %s1000
        %v1002 = vmul.f32 %v920, %v1001
        %v1003 = vmul.f32 %v921, %v1001
        %1006 = vrot.lane.b32.xlu0 %v1002, 126
        %v1007 = vpop.permute.xlu0 %1006
        %1008 = vrot.lane.b32.xlu0 %v1003, 126
        %v1009 = vpop.permute.xlu0 %1008
        %v1012 = vadd.f32 %v956, %v1007
        %v1013 = vadd.f32 %v957, %v1009
        %s1014 = sld [smem:[#allocation7 + $0x9]]
        %v1015 = vstv %s1014
        %v1016 = vmul.f32 %v922, %v1015
        %v1017 = vmul.f32 %v923, %v1015
        %1020 = vrot.lane.b32.xlu0 %v1016, 126
        %v1021 = vpop.permute.xlu0 %1020
        %1022 = vrot.lane.b32.xlu0 %v1017, 126
        %v1023 = vpop.permute.xlu0 %1022
        %v1026 = vadd.f32 %v970, %v1021
        %v1027 = vadd.f32 %v971, %v1023
        %s1028 = sld [smem:[#allocation7 + $0xa]]
        %v1029 = vstv %s1028
        %v1030 = vmul.f32 %v924, %v1029
        %v1031 = vmul.f32 %v925, %v1029
        %1034 = vrot.lane.b32.xlu0 %v1030, 126
        %v1035 = vpop.permute.xlu0 %1034
        %1036 = vrot.lane.b32.xlu0 %v1031, 126
        %v1037 = vpop.permute.xlu0 %1036
        %v1040 = vadd.f32 %v984, %v1035
        %v1041 = vadd.f32 %v985, %v1037
        %s1042 = sld [smem:[#allocation7 + $0xb]]
        %v1043 = vstv %s1042
        %v1044 = vmul.f32 %v926, %v1043
        %v1045 = vmul.f32 %v927, %v1043
        %1048 = vrot.lane.b32.xlu0 %v1044, 126
        %v1049 = vpop.permute.xlu0 %1048
        %1050 = vrot.lane.b32.xlu0 %v1045, 126
        %v1051 = vpop.permute.xlu0 %1050
        %v1054 = vadd.f32 %v998, %v1049
        %v1055 = vadd.f32 %v999, %v1051
        %v1056 = vld [vmem:[#allocation2 + $0x1] sm:$0xff]
        %v1057 = vld [vmem:[#allocation2 + $0x9] sm:$0xff]
        %v1058 = vld [vmem:[#allocation2 + $0x19] sm:$0xff]
        %v1059 = vld [vmem:[#allocation2 + $0x21] sm:$0xff]
        %v1060 = vld [vmem:[#allocation2 + $0x31] sm:$0xff]
        %v1061 = vld [vmem:[#allocation2 + $0x39] sm:$0xff]
        %v1062 = vld [vmem:[#allocation2 + $0x49] sm:$0xff]
        %v1063 = vld [vmem:[#allocation2 + $0x51] sm:$0xff]
        %s1064 = sld [smem:[#allocation7 + $0xc]]
        %v1065 = vstv %s1064
        %v1066 = vmul.f32 %v1056, %v1065
        %v1067 = vmul.f32 %v1057, %v1065
        %v1068 = vadd.f32 %v1012, %v1066
        %v1069 = vadd.f32 %v1013, %v1067
        %s1070 = sld [smem:[#allocation7 + $0xd]]
        %v1071 = vstv %s1070
        %v1072 = vmul.f32 %v1058, %v1071
        %v1073 = vmul.f32 %v1059, %v1071
        %v1074 = vadd.f32 %v1026, %v1072
        %v1075 = vadd.f32 %v1027, %v1073
        %s1076 = sld [smem:[#allocation7 + $0xe]]
        %v1077 = vstv %s1076
        %v1078 = vmul.f32 %v1060, %v1077
        %v1079 = vmul.f32 %v1061, %v1077
        %v1080 = vadd.f32 %v1040, %v1078
        %v1081 = vadd.f32 %v1041, %v1079
        %s1082 = sld [smem:[#allocation7 + $0xf]]
        %v1083 = vstv %s1082
        %v1084 = vmul.f32 %v1062, %v1083
        %v1085 = vmul.f32 %v1063, %v1083
        %v1086 = vadd.f32 %v1054, %v1084
        %v1087 = vadd.f32 %v1055, %v1085
        %s1088 = sld [smem:[#allocation7 + $0x10]]
        %v1089 = vstv %s1088
        %v1090 = vmul.f32 %v1056, %v1089
        %v1091 = vmul.f32 %v1057, %v1089
        %1094 = vrot.lane.b32.xlu0 %v1090, 127
        %v1095 = vpop.permute.xlu0 %1094
        %1096 = vrot.lane.b32.xlu0 %v1091, 127
        %v1097 = vpop.permute.xlu0 %1096
        %v1100 = vadd.f32 %v1068, %v1095
        %v1101 = vadd.f32 %v1069, %v1097
        %s1102 = sld [smem:[#allocation7 + $0x11]]
        %v1103 = vstv %s1102
        %v1104 = vmul.f32 %v1058, %v1103
        %v1105 = vmul.f32 %v1059, %v1103
        %1108 = vrot.lane.b32.xlu0 %v1104, 127
        %v1109 = vpop.permute.xlu0 %1108
        %1110 = vrot.lane.b32.xlu0 %v1105, 127
        %v1111 = vpop.permute.xlu0 %1110
        %v1114 = vadd.f32 %v1074, %v1109
        %v1115 = vadd.f32 %v1075, %v1111
        %s1116 = sld [smem:[#allocation7 + $0x12]]
        %v1117 = vstv %s1116
        %v1118 = vmul.f32 %v1060, %v1117
        %v1119 = vmul.f32 %v1061, %v1117
        %1122 = vrot.lane.b32.xlu0 %v1118, 127
        %v1123 = vpop.permute.xlu0 %1122
        %1124 = vrot.lane.b32.xlu0 %v1119, 127
        %v1125 = vpop.permute.xlu0 %1124
        %v1128 = vadd.f32 %v1080, %v1123
        %v1129 = vadd.f32 %v1081, %v1125
        %s1130 = sld [smem:[#allocation7 + $0x13]]
        %v1131 = vstv %s1130
        %v1132 = vmul.f32 %v1062, %v1131
        %v1133 = vmul.f32 %v1063, %v1131
        %1136 = vrot.lane.b32.xlu0 %v1132, 127
        %v1137 = vpop.permute.xlu0 %1136
        %1138 = vrot.lane.b32.xlu0 %v1133, 127
        %v1139 = vpop.permute.xlu0 %1138
        %v1142 = vadd.f32 %v1086, %v1137
        %v1143 = vadd.f32 %v1087, %v1139
        %s1144 = sld [smem:[#allocation7 + $0x14]]
        %v1145 = vstv %s1144
        %v1146 = vmul.f32 %v1056, %v1145
        %v1147 = vmul.f32 %v1057, %v1145
        %1150 = vrot.lane.b32.xlu0 %v1146, 126
        %v1151 = vpop.permute.xlu0 %1150
        %1152 = vrot.lane.b32.xlu0 %v1147, 126
        %v1153 = vpop.permute.xlu0 %1152
        %v1156 = vadd.f32 %v1100, %v1151
        %v1157 = vadd.f32 %v1101, %v1153
        %s1158 = sld [smem:[#allocation7 + $0x15]]
        %v1159 = vstv %s1158
        %v1160 = vmul.f32 %v1058, %v1159
        %v1161 = vmul.f32 %v1059, %v1159
        %1164 = vrot.lane.b32.xlu0 %v1160, 126
        %v1165 = vpop.permute.xlu0 %1164
        %1166 = vrot.lane.b32.xlu0 %v1161, 126
        %v1167 = vpop.permute.xlu0 %1166
        %v1170 = vadd.f32 %v1114, %v1165
        %v1171 = vadd.f32 %v1115, %v1167
        %s1172 = sld [smem:[#allocation7 + $0x16]]
        %v1173 = vstv %s1172
        %v1174 = vmul.f32 %v1060, %v1173
        %v1175 = vmul.f32 %v1061, %v1173
        %1178 = vrot.lane.b32.xlu0 %v1174, 126
        %v1179 = vpop.permute.xlu0 %1178
        %1180 = vrot.lane.b32.xlu0 %v1175, 126
        %v1181 = vpop.permute.xlu0 %1180
        %v1184 = vadd.f32 %v1128, %v1179
        %v1185 = vadd.f32 %v1129, %v1181
        %s1186 = sld [smem:[#allocation7 + $0x17]]
        %v1187 = vstv %s1186
        %v1188 = vmul.f32 %v1062, %v1187
        %v1189 = vmul.f32 %v1063, %v1187
        %1192 = vrot.lane.b32.xlu0 %v1188, 126
        %v1193 = vpop.permute.xlu0 %1192
        %1194 = vrot.lane.b32.xlu0 %v1189, 126
        %v1195 = vpop.permute.xlu0 %1194
        %v1198 = vadd.f32 %v1142, %v1193
        %v1199 = vadd.f32 %v1143, %v1195
        %v1200 = vld [vmem:[#allocation2 + $0x2] sm:$0xff]
        %v1201 = vld [vmem:[#allocation2 + $0xa] sm:$0xff]
        %v1202 = vld [vmem:[#allocation2 + $0x1a] sm:$0xff]
        %v1203 = vld [vmem:[#allocation2 + $0x22] sm:$0xff]
        %v1204 = vld [vmem:[#allocation2 + $0x32] sm:$0xff]
        %v1205 = vld [vmem:[#allocation2 + $0x3a] sm:$0xff]
        %v1206 = vld [vmem:[#allocation2 + $0x4a] sm:$0xff]
        %v1207 = vld [vmem:[#allocation2 + $0x52] sm:$0xff]
        %s1208 = sld [smem:[#allocation7 + $0x18]]
        %v1209 = vstv %s1208
        %v1210 = vmul.f32 %v1200, %v1209
        %v1211 = vmul.f32 %v1201, %v1209
        %v1212 = vadd.f32 %v1156, %v1210
        %v1213 = vadd.f32 %v1157, %v1211
        %s1214 = sld [smem:[#allocation7 + $0x19]]
        %v1215 = vstv %s1214
        %v1216 = vmul.f32 %v1202, %v1215
        %v1217 = vmul.f32 %v1203, %v1215
        %v1218 = vadd.f32 %v1170, %v1216
        %v1219 = vadd.f32 %v1171, %v1217
        %s1220 = sld [smem:[#allocation7 + $0x1a]]
        %v1221 = vstv %s1220
        %v1222 = vmul.f32 %v1204, %v1221
        %v1223 = vmul.f32 %v1205, %v1221
        %v1224 = vadd.f32 %v1184, %v1222
        %v1225 = vadd.f32 %v1185, %v1223
        %s1226 = sld [smem:[#allocation7 + $0x1b]]
        %v1227 = vstv %s1226
        %v1228 = vmul.f32 %v1206, %v1227
        %v1229 = vmul.f32 %v1207, %v1227
        %v1230 = vadd.f32 %v1198, %v1228
        %v1231 = vadd.f32 %v1199, %v1229
        %s1232 = sld [smem:[#allocation7 + $0x1c]]
        %v1233 = vstv %s1232
        %v1234 = vmul.f32 %v1200, %v1233
        %v1235 = vmul.f32 %v1201, %v1233
        %1238 = vrot.lane.b32.xlu0 %v1234, 127
        %v1239 = vpop.permute.xlu0 %1238
        %1240 = vrot.lane.b32.xlu0 %v1235, 127
        %v1241 = vpop.permute.xlu0 %1240
        %v1244 = vadd.f32 %v1212, %v1239
        %v1245 = vadd.f32 %v1213, %v1241
        %s1246 = sld [smem:[#allocation7 + $0x1d]]
        %v1247 = vstv %s1246
        %v1248 = vmul.f32 %v1202, %v1247
        %v1249 = vmul.f32 %v1203, %v1247
        %1252 = vrot.lane.b32.xlu0 %v1248, 127
        %v1253 = vpop.permute.xlu0 %1252
        %1254 = vrot.lane.b32.xlu0 %v1249, 127
        %v1255 = vpop.permute.xlu0 %1254
        %v1258 = vadd.f32 %v1218, %v1253
        %v1259 = vadd.f32 %v1219, %v1255
        %s1260 = sld [smem:[#allocation7 + $0x1e]]
        %v1261 = vstv %s1260
        %v1262 = vmul.f32 %v1204, %v1261
        %v1263 = vmul.f32 %v1205, %v1261
        %1266 = vrot.lane.b32.xlu0 %v1262, 127
        %v1267 = vpop.permute.xlu0 %1266
        %1268 = vrot.lane.b32.xlu0 %v1263, 127
        %v1269 = vpop.permute.xlu0 %1268
        %v1272 = vadd.f32 %v1224, %v1267
        %v1273 = vadd.f32 %v1225, %v1269
        %s1274 = sld [smem:[#allocation7 + $0x1f]]
        %v1275 = vstv %s1274
        %v1276 = vmul.f32 %v1206, %v1275
        %v1277 = vmul.f32 %v1207, %v1275
        %1280 = vrot.lane.b32.xlu0 %v1276, 127
        %v1281 = vpop.permute.xlu0 %1280
        %1282 = vrot.lane.b32.xlu0 %v1277, 127
        %v1283 = vpop.permute.xlu0 %1282
        %v1286 = vadd.f32 %v1230, %v1281
        %v1287 = vadd.f32 %v1231, %v1283
        %s1288 = sld [smem:[#allocation7 + $0x20]]
        %v1289 = vstv %s1288
        %v1290 = vmul.f32 %v1200, %v1289
        %v1291 = vmul.f32 %v1201, %v1289
        %1294 = vrot.lane.b32.xlu0 %v1290, 126
        %v1295 = vpop.permute.xlu0 %1294
        %1296 = vrot.lane.b32.xlu0 %v1291, 126
        %v1297 = vpop.permute.xlu0 %1296
        %v1300 = vadd.f32 %v1244, %v1295
        %v1301 = vadd.f32 %v1245, %v1297
        %s1302 = sld [smem:[#allocation7 + $0x21]]
        %v1303 = vstv %s1302
        %v1304 = vmul.f32 %v1202, %v1303
        %v1305 = vmul.f32 %v1203, %v1303
        %1308 = vrot.lane.b32.xlu0 %v1304, 126
        %v1309 = vpop.permute.xlu0 %1308
        %1310 = vrot.lane.b32.xlu0 %v1305, 126
        %v1311 = vpop.permute.xlu0 %1310
        %v1314 = vadd.f32 %v1258, %v1309
        %v1315 = vadd.f32 %v1259, %v1311
        %s1316 = sld [smem:[#allocation7 + $0x22]]
        %v1317 = vstv %s1316
        %v1318 = vmul.f32 %v1204, %v1317
        %v1319 = vmul.f32 %v1205, %v1317
        %1322 = vrot.lane.b32.xlu0 %v1318, 126
        %v1323 = vpop.permute.xlu0 %1322
        %1324 = vrot.lane.b32.xlu0 %v1319, 126
        %v1325 = vpop.permute.xlu0 %1324
        %v1328 = vadd.f32 %v1272, %v1323
        %v1329 = vadd.f32 %v1273, %v1325
        %s1330 = sld [smem:[#allocation7 + $0x23]]
        %v1331 = vstv %s1330
        %v1332 = vmul.f32 %v1206, %v1331
        %v1333 = vmul.f32 %v1207, %v1331
        %1336 = vrot.lane.b32.xlu0 %v1332, 126
        %v1337 = vpop.permute.xlu0 %1336
        %1338 = vrot.lane.b32.xlu0 %v1333, 126
        %v1339 = vpop.permute.xlu0 %1338
        %v1342 = vadd.f32 %v1286, %v1337
        %v1343 = vadd.f32 %v1287, %v1339
        %s1344 = sld [smem:[#allocation8]]
        %v1345 = vstv %s1344
        %v1346 = vmul.f32 %v1300, %v1345
        %v1347 = vmul.f32 %v1301, %v1345
        %s1348 = sld [smem:[#allocation8 + $0x1]]
        %v1349 = vstv %s1348
        %v1350 = vmul.f32 %v1314, %v1349
        %v1351 = vmul.f32 %v1315, %v1349
        %v1352 = vadd.f32 %v1346, %v1350
        %v1353 = vadd.f32 %v1347, %v1351
        %s1354 = sld [smem:[#allocation8 + $0x2]]
        %v1355 = vstv %s1354
        %v1356 = vmul.f32 %v1328, %v1355
        %v1357 = vmul.f32 %v1329, %v1355
        %v1358 = vadd.f32 %v1352, %v1356
        %v1359 = vadd.f32 %v1353, %v1357
        %s1360 = sld [smem:[#allocation8 + $0x3]]
        %v1361 = vstv %s1360
        %v1362 = vmul.f32 %v1342, %v1361
        %v1363 = vmul.f32 %v1343, %v1361
        %v1364 = vadd.f32 %v1358, %v1362
        %v1365 = vadd.f32 %v1359, %v1363
        %s1366 = sld [smem:[#allocation10]]
        %v1367 = vstv %s1366
        %v1368 = vadd.f32 %v1364, %v1367
        %v1369 = vadd.f32 %v1365, %v1367
        %s1370 = sld [smem:[#allocation8 + $0x4]]
        %v1371 = vstv %s1370
        %v1372 = vmul.f32 %v1300, %v1371
        %v1373 = vmul.f32 %v1301, %v1371
        %s1374 = sld [smem:[#allocation8 + $0x5]]
        %v1375 = vstv %s1374
        %v1376 = vmul.f32 %v1314, %v1375
        %v1377 = vmul.f32 %v1315, %v1375
        %v1378 = vadd.f32 %v1372, %v1376
        %v1379 = vadd.f32 %v1373, %v1377
        %s1380 = sld [smem:[#allocation8 + $0x6]]
        %v1381 = vstv %s1380
        %v1382 = vmul.f32 %v1328, %v1381
        %v1383 = vmul.f32 %v1329, %v1381
        %v1384 = vadd.f32 %v1378, %v1382
        %v1385 = vadd.f32 %v1379, %v1383
        %s1386 = sld [smem:[#allocation8 + $0x7]]
        %v1387 = vstv %s1386
        %v1388 = vmul.f32 %v1342, %v1387
        %v1389 = vmul.f32 %v1343, %v1387
        %v1390 = vadd.f32 %v1384, %v1388
        %v1391 = vadd.f32 %v1385, %v1389
        %s1392 = sld [smem:[#allocation10 + $0x1]]
        %v1393 = vstv %s1392
        %v1394 = vadd.f32 %v1390, %v1393
        %v1395 = vadd.f32 %v1391, %v1393
        %s1396 = sld [smem:[#allocation8 + $0x8]]
        %v1397 = vstv %s1396
        %v1398 = vmul.f32 %v1300, %v1397
        %v1399 = vmul.f32 %v1301, %v1397
        %s1400 = sld [smem:[#allocation8 + $0x9]]
        %v1401 = vstv %s1400
        %v1402 = vmul.f32 %v1314, %v1401
        %v1403 = vmul.f32 %v1315, %v1401
        %v1404 = vadd.f32 %v1398, %v1402
        %v1405 = vadd.f32 %v1399, %v1403
        %s1406 = sld [smem:[#allocation8 + $0xa]]
        %v1407 = vstv %s1406
        %v1408 = vmul.f32 %v1328, %v1407
        %v1409 = vmul.f32 %v1329, %v1407
        %v1410 = vadd.f32 %v1404, %v1408
        %v1411 = vadd.f32 %v1405, %v1409
        %s1412 = sld [smem:[#allocation8 + $0xb]]
        %v1413 = vstv %s1412
        %v1414 = vmul.f32 %v1342, %v1413
        %v1415 = vmul.f32 %v1343, %v1413
        %v1416 = vadd.f32 %v1410, %v1414
        %v1417 = vadd.f32 %v1411, %v1415
        %s1418 = sld [smem:[#allocation10 + $0x2]]
        %v1419 = vstv %s1418
        %v1420 = vadd.f32 %v1416, %v1419
        %v1421 = vadd.f32 %v1417, %v1419
        %s1422 = sld [smem:[#allocation8 + $0xc]]
        %v1423 = vstv %s1422
        %v1424 = vmul.f32 %v1300, %v1423
        %v1425 = vmul.f32 %v1301, %v1423
        %s1426 = sld [smem:[#allocation8 + $0xd]]
        %v1427 = vstv %s1426
        %v1428 = vmul.f32 %v1314, %v1427
        %v1429 = vmul.f32 %v1315, %v1427
        %v1430 = vadd.f32 %v1424, %v1428
        %v1431 = vadd.f32 %v1425, %v1429
        %s1432 = sld [smem:[#allocation8 + $0xe]]
        %v1433 = vstv %s1432
        %v1434 = vmul.f32 %v1328, %v1433
        %v1435 = vmul.f32 %v1329, %v1433
        %v1436 = vadd.f32 %v1430, %v1434
        %v1437 = vadd.f32 %v1431, %v1435
        %s1438 = sld [smem:[#allocation8 + $0xf]]
        %v1439 = vstv %s1438
        %v1440 = vmul.f32 %v1342, %v1439
        %v1441 = vmul.f32 %v1343, %v1439
        %v1442 = vadd.f32 %v1436, %v1440
        %v1443 = vadd.f32 %v1437, %v1441
        %s1444 = sld [smem:[#allocation10 + $0x3]]
        %v1445 = vstv %s1444
        %v1446 = vadd.f32 %v1442, %v1445
        %v1447 = vadd.f32 %v1443, %v1445
        %v1448 = vld [vmem:[%s217] sm:$0xff]
        %v1449 = vld [vmem:[%s217 + $0x8] sm:$0xff]
        %v1450 = vadd.f32 %v1448, %v1368
        %v1451 = vadd.f32 %v1449, %v1369
        %vm1452 = vcmask 130048
        %1453 = vst.msk [vmem:[%s254] sm:$0xff] %vm1452, %v1450
        %1454 = vst.msk [vmem:[%s254 + $0x8] sm:$0xff] %vm1452, %v1451
        %s1455 = scalar_lea.vmem %s217, 16 [#allocation3]
        %v1456 = vld [vmem:[%s1455] sm:$0xff]
        %v1457 = vld [vmem:[%s1455 + $0x8] sm:$0xff]
        %v1458 = vadd.f32 %v1456, %v1394
        %v1459 = vadd.f32 %v1457, %v1395
        %s1460 = scalar_lea.vmem %s254, 16 [#allocation11]
        %1461 = vst.msk [vmem:[%s1460] sm:$0xff] %vm1452, %v1458
        %1462 = vst.msk [vmem:[%s1460 + $0x8] sm:$0xff] %vm1452, %v1459
        %s1463 = scalar_lea.vmem %s217, 32 [#allocation3]
        %v1464 = vld [vmem:[%s1463] sm:$0xff]
        %v1465 = vld [vmem:[%s1463 + $0x8] sm:$0xff]
        %v1466 = vadd.f32 %v1464, %v1420
        %v1467 = vadd.f32 %v1465, %v1421
        %s1468 = scalar_lea.vmem %s254, 32 [#allocation11]
        %1469 = vst.msk [vmem:[%s1468] sm:$0xff] %vm1452, %v1466
        %1470 = vst.msk [vmem:[%s1468 + $0x8] sm:$0xff] %vm1452, %v1467
        %s1471 = scalar_lea.vmem %s217, 48 [#allocation3]
        %v1472 = vld [vmem:[%s1471] sm:$0xff]
        %v1473 = vld [vmem:[%s1471 + $0x8] sm:$0xff]
        %v1474 = vadd.f32 %v1472, %v1446
        %v1475 = vadd.f32 %v1473, %v1447
        %s1476 = scalar_lea.vmem %s254, 48 [#allocation11]
        %1477 = vst.msk [vmem:[%s1476] sm:$0xff] %vm1452, %v1474
        %1478 = vst.msk [vmem:[%s1476 + $0x8] sm:$0xff] %vm1452, %v1475
        %s1479 = sand.u32 %s120, 1
        %s1480 = scalar_lea.sflag [#allocation5], %s1479
        %s1481 = sand.u32 %s120, 1
        %s1482 = smul.addr %s1481, 64
        %s1483 = scalar_lea.vmem [#allocation11], %s1482
        // Predicated region
        $region53: #{tpu_custom_call.1} parent=35 // pred_check
          %p1484 = pneg %p130
        $region54: #{tpu_custom_call.1} parent=35 // pred_check_branch
          %1486 = sbr.rel (%p1484) target = $region56
        $region55: #{tpu_custom_call.1} parent=35 // pred_region
          %s1488 = ssub.s32 1024, 1024
          %1489 = vsyncadd %s1480, %s1488
          %s1490 = smul.addr %s23, 8
          %s1491 = smul.addr %s1490, 128
          %s1492 = scalar_lea.hbm %s4, %s1491
          %s1493 = sshll.u32 %s1483, 4
          %s1494 = int_to_ptr.vmem [resolvable:$true] %s1493
          %1499 = dma.vmem_to_hbm [thread:$0]  %s1494, 1024, %s1492, %s1480, 128, 128, 8
        $region56: #{tpu_custom_call.1} parent=35 // pred_fallthru
          _
      $region36: #{tpu_custom_call.1} parent=5 // pred_fallthru
        _
      %p1500 = scmp.le.s32.totalorder 2, %s18
      // Predicated region
      $region57: #{tpu_custom_call.1} parent=5 // pred_check
        %p1501 = pneg %p1500
      $region58: #{tpu_custom_call.1} parent=5 // pred_check_branch
        %1503 = sbr.rel (%p1501) target = $region60
      $region59: #{tpu_custom_call.1} parent=5 // pred_region
        %s1504 = ssub.s32 %s18, 2
        // Predicated region
        $region61: #{tpu_custom_call.1} parent=59 // pred_check
          %p1505 = pneg %p136
        $region62: #{tpu_custom_call.1} parent=59 // pred_check_branch
          %1507 = sbr.rel (%p1505) target = $region64
        $region63: #{tpu_custom_call.1} parent=59 // pred_region
          %s1508 = sand.u32 %s121, 1
          %s1509 = scalar_lea.sflag [#allocation5], %s1508
          %s1510 = sand.u32 %s121, 1
          %s1511 = smul.addr %s1510, 64
          %s1512 = scalar_lea.vmem [#allocation11], %s1511
          %1513 = dma.done %s1509, 1024
        $region64: #{tpu_custom_call.1} parent=59 // pred_fallthru
          _
      $region60: #{tpu_custom_call.1} parent=5 // pred_fallthru
        _
    $region6: #{tpu_custom_call.1} parent=1 // loop_footer
      %s22 = sadd.s32 1, %s18
    $region7: #{tpu_custom_call.1} parent=1 // loop_footer_branch
      %17 = sbr.rel target = $region3
    $region8: #{tpu_custom_call.1} parent=1 // loop_exit
      _
    %1514 = vsyncpa [#allocation4], 1
    %s1515 = scalar_lea.sflag [#allocation4], 1
    %1516 = vsyncpa %s1515, 1
    %1517 = vsyncpa [#allocation5], 1
    %s1518 = scalar_lea.sflag [#allocation5], 1
    %1519 = vsyncpa %s1518, 1
    %1520 = vsyncpa [#allocation6], 1
    %s1521 = scalar_lea.sflag [#allocation6], 1
    %1522 = vsyncpa %s1521, 1
    %1523 = vsyncpa [#allocation9], 1

</llo_original>
